<compile_context>
chip_gen: v6e
topology: v6e:2x2x1
jax: 0.10.0
libtpu: 0.0.40
codegen_flags: <defaults>
</compile_context>

<pallas_src>
import jax
import jax.numpy as jnp
import numpy as np
from jax import lax
from jax.experimental import pallas as pl
from jax.experimental.pallas import tpu as pltpu

BN_EPS = 1e-5


def _vmem_limit_bytes():
    """Generation-aware VMEM budget (v5e/v6e: 128 MiB physical, v7x: 64 MiB)."""
    try:
        cap = int(pltpu.get_tpu_info().vmem_capacity_bytes)
    except Exception:
        cap = 64 * 1024 * 1024
    return int(min(cap * 3 // 4, 96 * 1024 * 1024))


# ---------------------------------------------------------------------------
# Pass 1: conv 3x3 (pad 1) + bias + ReLU, plus per-image BN partial statistics
# ---------------------------------------------------------------------------
def _conv1_relu_stats_kernel(x_ref, m1_ref, b1_ref, y_ref, sum_ref, ssq_ref):
    """Per image: y = relu(conv3x3(x) + b1); per-(w, channel) sum / sum-of-squares.

    x_ref  : (1, H+2, W*Cin)      bf16   row-padded input, (w, ci) folded into lanes
    m1_ref : (3, W*Cin, W*Cout)   bf16   banded weights, one per kh tap
    b1_ref : (1, W*Cout)          f32    bias tiled over w
    y_ref  : (1, H, W*Cout)       bf16   conv1+ReLU activations (lane = w*Cout + c)
    sum_ref, ssq_ref : (1, 1, W*Cout) f32  per-image BN partial statistics
    """
    H = y_ref.shape[1]
    xv = x_ref[0]                                     # (H+2, W*Cin)
    acc = jnp.zeros(y_ref.shape[1:], jnp.float32)     # (H, W*Cout)
    for kh in range(3):                               # 3 long-K matmuls, no per-tap patches
        acc = acc + jnp.dot(xv[kh:kh + H, :], m1_ref[kh],
                            preferred_element_type=jnp.float32)
    yv = jnp.maximum(acc + b1_ref[...], 0.0)          # bias + ReLU in f32
    y_ref[0] = yv.astype(y_ref.dtype)                 # bf16, lane-dense store
    sum_ref[...] = jnp.sum(yv, axis=0, keepdims=True)[None]   # stats from f32 accumulator
    ssq_ref[...] = jnp.sum(yv * yv, axis=0, keepdims=True)[None]


# ---------------------------------------------------------------------------
# Pass 2: BN affine + conv 4x4 / stride 2 / pad 1
# ---------------------------------------------------------------------------
def _bn_conv2_kernel(z_ref, scale_ref, shift_ref, a_ref, b_ref, c_ref, bias_ref, o_ref):
    """Per image: h = y*scale + shift (BN affine); o = conv4x4_s2_p1(h) + b2.

    z_ref  : (1, Ho, 2*W*Cout)  bf16  pre-BN activations; row q packs h rows (2q, 2q+1)
    scale_ref, shift_ref : (1, 2*W*Cout) f32
    a_ref  : (2*W*Cout, Wo*Cout) bf16  kh=1 (top half) / kh=2 (bottom half) banded weights
    b_ref  : (W*Cout, Wo*Cout)   bf16  kh=0 banded weights (reads h row 2*oy-1)
    c_ref  : (W*Cout, Wo*Cout)   bf16  kh=3 banded weights (reads h row 2*oy+2)
    bias_ref : (1, Wo*Cout) f32
    o_ref  : (1, Ho, Wo*Cout) f32
    """
    Ho = o_ref.shape[1]
    L2 = z_ref.shape[2]
    L = L2 // 2
    # BN affine in f32, single elementwise pass over the block.
    h = (z_ref[0].astype(jnp.float32) * scale_ref[...] + shift_ref[...]).astype(jnp.bfloat16)
    # One-row zero halo at each end (replaces 16 shifted full-plane copies).
    zero = jnp.zeros((1, L2), jnp.bfloat16)
    hext = jnp.concatenate([zero, h, zero], axis=0)                 # (Ho+2, 2*W*Cout)
    acc = jnp.dot(hext[1:Ho + 1, :], a_ref[...],                    # kh=1,2: rows 2oy, 2oy+1
                  preferred_element_type=jnp.float32)
    acc = acc + jnp.dot(hext[0:Ho, L:], b_ref[...],                 # kh=0: row 2oy-1
                        preferred_element_type=jnp.float32)
    acc = acc + jnp.dot(hext[2:Ho + 2, :L], c_ref[...],             # kh=3: row 2oy+2
                        preferred_element_type=jnp.float32)
    o_ref[0] = acc + bias_ref[...]


# ---------------------------------------------------------------------------
# Banded ("Toeplitz") weight construction (tiny, wrapper-side)
# ---------------------------------------------------------------------------
def _banded_conv1_weights(w1, W):
    """M1[kh, w*Cin+ci, ow*Cout+co] = w1[co, ci, kh, w-ow+1] (3x3 conv, pad 1)."""
    Cout, Cin = w1.shape[0], w1.shape[1]
    w_idx = jnp.arange(W)[:, None]
    ow_idx = jnp.arange(W)[None, :]
    kw = w_idx - ow_idx + 1
    valid = (kw >= 0) & (kw <= 2)
    w1t = jnp.transpose(w1, (2, 3, 1, 0))               # (kh, kw, ci, co)
    m = w1t[:, jnp.clip(kw, 0, 2)]                      # (3, W, W, Cin, Cout)
    m = jnp.where(valid[None, :, :, None, None], m, 0.0)
    m = jnp.transpose(m, (0, 1, 3, 2, 4)).reshape(3, W * Cin, W * Cout)
    return m.astype(jnp.bfloat16)


def _banded_conv2_weights(w2, W):
    """M2[kh, w*C+ci, ox*C+co] = w2[co, ci, kh, w-2*ox+1] (4x4 conv, stride 2, pad 1)."""
    C = w2.shape[0]
    Wo = W // 2
    w_idx = jnp.arange(W)[:, None]
    ox_idx = jnp.arange(Wo)[None, :]
    kw = w_idx - 2 * ox_idx + 1
    valid = (kw >= 0) & (kw <= 3)
    w2t = jnp.transpose(w2, (2, 3, 1, 0))               # (kh, kw, ci, co)
    m = w2t[:, jnp.clip(kw, 0, 3)]                      # (4, W, Wo, C, C)
    m = jnp.where(valid[None, :, :, None, None], m, 0.0)
    m = jnp.transpose(m, (0, 1, 3, 2, 4)).reshape(4, W * C, Wo * C)
    a = jnp.concatenate([m[1], m[2]], axis=0)           # even row (kh=1) | odd row (kh=2)
    return a.astype(jnp.bfloat16), m[0].astype(jnp.bfloat16), m[3].astype(jnp.bfloat16)


# ---------------------------------------------------------------------------
# Block forward
# ---------------------------------------------------------------------------
def block_forward(x_nchw, params):
    N, Cin, H, W = x_nchw.shape
    assert H % 2 == 0 and W % 2 == 0, "stride-2 transform needs even spatial dims"
    Ho, Wo = H // 2, W // 2
    Cout = params["w1"].shape[0]
    Lx, Ly, Lo = W * Cin, W * Cout, Wo * Cout

    # ---- layout glue (one fused transpose/pad/cast pass over x) ------------
    # TODO(synk): accepting NHWC/bf16 input directly would remove this HBM pass.
    x = jnp.transpose(x_nchw, (0, 2, 3, 1))
    x = jnp.pad(x, ((0, 0), (1, 1), (0, 0), (0, 0)))               # 1 zero row top/bottom
    x_in = x.reshape(N, H + 2, Lx).astype(jnp.bfloat16)

    m1 = _banded_conv1_weights(params["w1"].astype(jnp.float32), W)
    a_mat, b_mat, c_mat = _banded_conv2_weights(params["w2"].astype(jnp.float32), W)
    b1_t = jnp.tile(params["b1"].astype(jnp.float32), W).reshape(1, Ly)
    b2_t = jnp.tile(params["b2"].astype(jnp.float32), Wo).reshape(1, Lo)

    cparams = pltpu.CompilerParams(dimension_semantics=("parallel",),
                                   vmem_limit_bytes=_vmem_limit_bytes())

    # ---- pass 1: conv1 + bias + ReLU, per-image partial BN stats -----------
    y, psum, pssq = pl.pallas_call(
        _conv1_relu_stats_kernel,
        grid=(N,),
        in_specs=[
            pl.BlockSpec((1, H + 2, Lx), lambda n: (n, 0, 0)),
            pl.BlockSpec((3, Lx, Ly), lambda n: (0, 0, 0)),
            pl.BlockSpec((1, Ly), lambda n: (0, 0)),
        ],
        out_specs=(
            pl.BlockSpec((1, H, Ly), lambda n: (n, 0, 0)),
            pl.BlockSpec((1, 1, Ly), lambda n: (n, 0, 0)),
            pl.BlockSpec((1, 1, Ly), lambda n: (n, 0, 0)),
        ),
        out_shape=(
            jax.ShapeDtypeStruct((N, H, Ly), jnp.bfloat16),        # bf16, unpadded, lane-dense
            jax.ShapeDtypeStruct((N, 1, Ly), jnp.float32),
            jax.ShapeDtypeStruct((N, 1, Ly), jnp.float32),
        ),
        compiler_params=cparams,
    )(x_in, m1, b1_t)

    # ---- fold batch statistics into per-channel scale / shift (tiny) -------
    M = N * H * W
    tot = jnp.sum(psum.reshape(N, W, Cout), axis=(0, 1))           # (Cout,)
    tot2 = jnp.sum(pssq.reshape(N, W, Cout), axis=(0, 1))
    mean = tot / M
    var = jnp.maximum(tot2 / M - mean * mean, 0.0)                 # biased, as PyTorch BN
    inv = params["gamma"].astype(jnp.float32) * lax.rsqrt(var + BN_EPS)
    shift = params["beta"].astype(jnp.float32) - mean * inv
    scale_t = jnp.tile(inv, 2 * W).reshape(1, 2 * Ly)
    shift_t = jnp.tile(shift, 2 * W).reshape(1, 2 * Ly)

    # ---- pass 2: BN affine + conv 4x4 / stride 2 / pad 1 --------------------
    z = y.reshape(N, Ho, 2 * Ly)                                   # free: packs row pair (2q, 2q+1)
    out_p = pl.pallas_call(
        _bn_conv2_kernel,
        grid=(N,),
        in_specs=[
            pl.BlockSpec((1, Ho, 2 * Ly), lambda n: (n, 0, 0)),
            pl.BlockSpec((1, 2 * Ly), lambda n: (0, 0)),
            pl.BlockSpec((1, 2 * Ly), lambda n: (0, 0)),
            pl.BlockSpec((2 * Ly, Lo), lambda n: (0, 0)),
            pl.BlockSpec((Ly, Lo), lambda n: (0, 0)),
            pl.BlockSpec((Ly, Lo), lambda n: (0, 0)),
            pl.BlockSpec((1, Lo), lambda n: (0, 0)),
        ],
        out_specs=pl.BlockSpec((1, Ho, Lo), lambda n: (n, 0, 0)),
        out_shape=jax.ShapeDtypeStruct((N, Ho, Lo), jnp.float32),
        compiler_params=cparams,
    )(z, scale_t, shift_t, a_mat, b_mat, c_mat, b2_t)

    out = out_p.reshape(N, Ho, Wo, Cout)
    # TODO(synk): emit NHWC directly if the consumer allows it (saves one HBM pass).
    return jnp.transpose(out, (0, 3, 1, 2))                        # back to NCHW


# ---------------------------------------------------------------------------
# Reference with matched MXU numerics (bf16 conv inputs, f32 accumulation / BN)
# ---------------------------------------------------------------------------
def block_forward_ref(x, params):
    dn = ("NCHW", "OIHW", "NCHW")
    y = lax.conv_general_dilated(
        x.astype(jnp.bfloat16), params["w1"].astype(jnp.bfloat16),
        window_strides=(1, 1), padding=((1, 1), (1, 1)), dimension_numbers=dn,
        preferred_element_type=jnp.float32)
    y = jnp.maximum(y + params["b1"].reshape(1, -1, 1, 1), 0.0)
    mean = jnp.mean(y, axis=(0, 2, 3), keepdims=True)
    var = jnp.mean((y - mean) ** 2, axis=(0, 2, 3), keepdims=True)  # biased, as PyTorch BN
    h = (y - mean) * lax.rsqrt(var + BN_EPS)
    h = h * params["gamma"].reshape(1, -1, 1, 1) + params["beta"].reshape(1, -1, 1, 1)
    z = lax.conv_general_dilated(
        h.astype(jnp.bfloat16), params["w2"].astype(jnp.bfloat16),
        window_strides=(2, 2), padding=((1, 1), (1, 1)), dimension_numbers=dn,
        preferred_element_type=jnp.float32)
    return z + params["b2"].reshape(1, -1, 1, 1)


# ---------------------------------------------------------------------------
# Deterministic parameter init (Conv2d-style uniform(+-1/sqrt(fan_in)))
# ---------------------------------------------------------------------------
def init_params(key, in_ch, out_ch):
    k1, k2, k3, k4 = jax.random.split(key, 4)
    bnd1 = 1.0 / np.sqrt(in_ch * 3 * 3)
    bnd2 = 1.0 / np.sqrt(out_ch * 4 * 4)
    return {
        "w1": jax.random.uniform(k1, (out_ch, in_ch, 3, 3), jnp.float32, -bnd1, bnd1),
        "b1": jax.random.uniform(k2, (out_ch,), jnp.float32, -bnd1, bnd1),
        "w2": jax.random.uniform(k3, (out_ch, out_ch, 4, 4), jnp.float32, -bnd2, bnd2),
        "b2": jax.random.uniform(k4, (out_ch,), jnp.float32, -bnd2, bnd2),
        "gamma": jnp.ones((out_ch,), jnp.float32),
        "beta": jnp.zeros((out_ch,), jnp.float32),
    }


if __name__ == "__main__":
    key = jax.random.PRNGKey(0)
    kx, kp = jax.random.split(key)

    in_ch, out_ch = 4, 8
    x = jax.random.normal(kx, (2, in_ch, 16, 16), jnp.float32)   # NCHW, like PyTorch
    params = init_params(kp, in_ch, out_ch)

    fwd = jax.jit(block_forward)
    out = jax.block_until_ready(fwd(x, params))
    ref = jax.block_until_ready(block_forward_ref(x, params))

    assert out.shape == (2, out_ch, 8, 8), out.shape
    # Tolerance accounts for the bf16 storage of the conv1/ReLU intermediate
    # (recommended by the perf review); the reference keeps it in f32.
    np.testing.assert_allclose(np.asarray(out), np.asarray(ref), rtol=1e-2, atol=1e-2)
    print("KERNEL_OK")
</pallas_src>

<mosaic_0001>
module attributes {stable_mosaic.version = 11 : i64} {
  func.func @_conv1_relu_stats_kernel(%arg0: i32, %arg1: memref<1x18x64xbf16, #tpu.memory_space<vmem>>, %arg2: memref<3x64x128xbf16, #tpu.memory_space<vmem>>, %arg3: memref<1x128xf32, #tpu.memory_space<vmem>>, %arg4: memref<1x16x128xbf16, #tpu.memory_space<vmem>>, %arg5: memref<1x1x128xf32, #tpu.memory_space<vmem>>, %arg6: memref<1x1x128xf32, #tpu.memory_space<vmem>>) attributes {dimension_semantics = [#tpu.dimension_semantics<parallel>], iteration_bounds = array<i64: 2>, scalar_prefetch = 0 : i64, scratch_operands = 0 : i64, tpu.core_type = #tpu.core_type<tc>, window_params = [{transform_indices = @transform_0, window_bounds = array<i64: 1, 18, 64>}, {pipeline_mode = #tpu.pipeline_mode<synchronous>, transform_indices = @transform_1, window_bounds = array<i64: 3, 64, 128>}, {pipeline_mode = #tpu.pipeline_mode<synchronous>, transform_indices = @transform_2, window_bounds = array<i64: 1, 128>}, {transform_indices = @transform_3, window_bounds = array<i64: 1, 16, 128>}, {transform_indices = @transform_4, window_bounds = array<i64: 1, 1, 128>}, {transform_indices = @transform_5, window_bounds = array<i64: 1, 1, 128>}]} {
    %c0 = arith.constant 0 : index
    %c0_0 = arith.constant 0 : index
    %c0_1 = arith.constant 0 : index
    %0 = vector.load %arg1[%c0, %c0_0, %c0_1] : memref<1x18x64xbf16, #tpu.memory_space<vmem>>, vector<1x18x64xbf16>
    %1 = vector.shape_cast %0 : vector<1x18x64xbf16> to vector<18x64xbf16>
    %cst = arith.constant 0.000000e+00 : f32
    %2 = vector.broadcast %cst : f32 to vector<16x128xf32>
    %3 = vector.extract_strided_slice %1 {offsets = [0, 0], sizes = [16, 64], strides = [1, 1]} : vector<18x64xbf16> to vector<16x64xbf16>
    %c0_2 = arith.constant 0 : index
    %c0_3 = arith.constant 0 : index
    %c0_4 = arith.constant 0 : index
    %4 = vector.load %arg2[%c0_2, %c0_3, %c0_4] : memref<3x64x128xbf16, #tpu.memory_space<vmem>>, vector<1x64x128xbf16>
    %5 = vector.shape_cast %4 : vector<1x64x128xbf16> to vector<64x128xbf16>
    %cst_5 = arith.constant dense<0.000000e+00> : vector<16x128xf32>
    %6 = tpu.matmul %3, %5, %cst_5 {dimension_numbers = #tpu.dot_dimension_numbers<[1], [0], [0], [1], [0, 0, 1, 1], [], []>} : vector<16x64xbf16>, vector<64x128xbf16>, vector<16x128xf32> -> vector<16x128xf32>
    %7 = arith.addf %2, %6 : vector<16x128xf32>
    %8 = vector.extract_strided_slice %1 {offsets = [1, 0], sizes = [16, 64], strides = [1, 1]} : vector<18x64xbf16> to vector<16x64xbf16>
    %c1 = arith.constant 1 : index
    %c0_6 = arith.constant 0 : index
    %c0_7 = arith.constant 0 : index
    %9 = vector.load %arg2[%c1, %c0_6, %c0_7] : memref<3x64x128xbf16, #tpu.memory_space<vmem>>, vector<1x64x128xbf16>
    %10 = vector.shape_cast %9 : vector<1x64x128xbf16> to vector<64x128xbf16>
    %cst_8 = arith.constant dense<0.000000e+00> : vector<16x128xf32>
    %11 = tpu.matmul %8, %10, %cst_8 {dimension_numbers = #tpu.dot_dimension_numbers<[1], [0], [0], [1], [0, 0, 1, 1], [], []>} : vector<16x64xbf16>, vector<64x128xbf16>, vector<16x128xf32> -> vector<16x128xf32>
    %12 = arith.addf %7, %11 : vector<16x128xf32>
    %13 = vector.extract_strided_slice %1 {offsets = [2, 0], sizes = [16, 64], strides = [1, 1]} : vector<18x64xbf16> to vector<16x64xbf16>
    %c2 = arith.constant 2 : index
    %c0_9 = arith.constant 0 : index
    %c0_10 = arith.constant 0 : index
    %14 = vector.load %arg2[%c2, %c0_9, %c0_10] : memref<3x64x128xbf16, #tpu.memory_space<vmem>>, vector<1x64x128xbf16>
    %15 = vector.shape_cast %14 : vector<1x64x128xbf16> to vector<64x128xbf16>
    %cst_11 = arith.constant dense<0.000000e+00> : vector<16x128xf32>
    %16 = tpu.matmul %13, %15, %cst_11 {dimension_numbers = #tpu.dot_dimension_numbers<[1], [0], [0], [1], [0, 0, 1, 1], [], []>} : vector<16x64xbf16>, vector<64x128xbf16>, vector<16x128xf32> -> vector<16x128xf32>
    %17 = arith.addf %12, %16 : vector<16x128xf32>
    %c0_12 = arith.constant 0 : index
    %c0_13 = arith.constant 0 : index
    %18 = vector.load %arg3[%c0_12, %c0_13] : memref<1x128xf32, #tpu.memory_space<vmem>>, vector<1x128xf32>
    %19 = vector.broadcast %18 : vector<1x128xf32> to vector<16x128xf32>
    %20 = arith.addf %17, %19 : vector<16x128xf32>
    %cst_14 = arith.constant 0.000000e+00 : f32
    %21 = vector.broadcast %cst_14 : f32 to vector<16x128xf32>
    %22 = arith.maximumf %20, %21 : vector<16x128xf32>
    %23 = arith.truncf %22 : vector<16x128xf32> to vector<16x128xbf16>
    %c0_15 = arith.constant 0 : index
    %c0_16 = arith.constant 0 : index
    %c0_17 = arith.constant 0 : index
    %24 = vector.load %arg4[%c0_15, %c0_16, %c0_17] : memref<1x16x128xbf16, #tpu.memory_space<vmem>>, vector<1x16x128xbf16>
    %25 = vector.shape_cast %24 : vector<1x16x128xbf16> to vector<16x128xbf16>
    %26 = vector.shape_cast %23 : vector<16x128xbf16> to vector<1x16x128xbf16>
    tpu.vector_store %arg4[%c0_15, %c0_16, %c0_17], %26 {strides = array<i32>} : memref<1x16x128xbf16, #tpu.memory_space<vmem>>, vector<1x16x128xbf16>,
    %cst_18 = arith.constant dense<0.000000e+00> : vector<128xf32>
    %27 = vector.multi_reduction <add>, %22, %cst_18 [0] : vector<16x128xf32> to vector<128xf32>
    %28 = vector.shape_cast %27 : vector<128xf32> to vector<1x128xf32>
    %29 = vector.shape_cast %28 : vector<1x128xf32> to vector<1x1x128xf32>
    %c0_19 = arith.constant 0 : index
    %c0_20 = arith.constant 0 : index
    %c0_21 = arith.constant 0 : index
    %30 = vector.load %arg5[%c0_19, %c0_20, %c0_21] : memref<1x1x128xf32, #tpu.memory_space<vmem>>, vector<1x1x128xf32>
    tpu.vector_store %arg5[%c0_19, %c0_20, %c0_21], %29 {strides = array<i32>} : memref<1x1x128xf32, #tpu.memory_space<vmem>>, vector<1x1x128xf32>,
    %31 = arith.mulf %22, %22 : vector<16x128xf32>
    %cst_22 = arith.constant dense<0.000000e+00> : vector<128xf32>
    %32 = vector.multi_reduction <add>, %31, %cst_22 [0] : vector<16x128xf32> to vector<128xf32>
    %33 = vector.shape_cast %32 : vector<128xf32> to vector<1x128xf32>
    %34 = vector.shape_cast %33 : vector<1x128xf32> to vector<1x1x128xf32>
    %c0_23 = arith.constant 0 : index
    %c0_24 = arith.constant 0 : index
    %c0_25 = arith.constant 0 : index
    %35 = vector.load %arg6[%c0_23, %c0_24, %c0_25] : memref<1x1x128xf32, #tpu.memory_space<vmem>>, vector<1x1x128xf32>
    tpu.vector_store %arg6[%c0_23, %c0_24, %c0_25], %34 {strides = array<i32>} : memref<1x1x128xf32, #tpu.memory_space<vmem>>, vector<1x1x128xf32>,
    return
  }
  func.func @transform_0(%arg0: i32) -> (i32, i32, i32) {
    %c0_i32 = arith.constant 0 : i32
    %c0_i32_0 = arith.constant 0 : i32
    %c0_i32_1 = arith.constant 0 : i32
    return %arg0, %c0_i32, %c0_i32_0 : i32, i32, i32
  }
  func.func @transform_1(%arg0: i32) -> (i32, i32, i32) {
    %c0_i32 = arith.constant 0 : i32
    %c0_i32_0 = arith.constant 0 : i32
    %c0_i32_1 = arith.constant 0 : i32
    %c0_i32_2 = arith.constant 0 : i32
    return %c0_i32, %c0_i32_0, %c0_i32_1 : i32, i32, i32
  }
  func.func @transform_2(%arg0: i32) -> (i32, i32) {
    %c0_i32 = arith.constant 0 : i32
    %c0_i32_0 = arith.constant 0 : i32
    %c0_i32_1 = arith.constant 0 : i32
    return %c0_i32, %c0_i32_0 : i32, i32
  }
  func.func @transform_3(%arg0: i32) -> (i32, i32, i32) {
    %c0_i32 = arith.constant 0 : i32
    %c0_i32_0 = arith.constant 0 : i32
    %c0_i32_1 = arith.constant 0 : i32
    return %arg0, %c0_i32, %c0_i32_0 : i32, i32, i32
  }
  func.func @transform_4(%arg0: i32) -> (i32, i32, i32) {
    %c0_i32 = arith.constant 0 : i32
    %c0_i32_0 = arith.constant 0 : i32
    %c0_i32_1 = arith.constant 0 : i32
    return %arg0, %c0_i32, %c0_i32_0 : i32, i32, i32
  }
  func.func @transform_5(%arg0: i32) -> (i32, i32, i32) {
    %c0_i32 = arith.constant 0 : i32
    %c0_i32_0 = arith.constant 0 : i32
    %c0_i32_1 = arith.constant 0 : i32
    return %arg0, %c0_i32, %c0_i32_0 : i32, i32, i32
  }
}

module attributes {stable_mosaic.version = 11 : i64} {
  func.func @_bn_conv2_kernel(%arg0: i32, %arg1: memref<1x8x256xbf16, #tpu.memory_space<vmem>>, %arg2: memref<1x256xf32, #tpu.memory_space<vmem>>, %arg3: memref<1x256xf32, #tpu.memory_space<vmem>>, %arg4: memref<256x64xbf16, #tpu.memory_space<vmem>>, %arg5: memref<128x64xbf16, #tpu.memory_space<vmem>>, %arg6: memref<128x64xbf16, #tpu.memory_space<vmem>>, %arg7: memref<1x64xf32, #tpu.memory_space<vmem>>, %arg8: memref<1x8x64xf32, #tpu.memory_space<vmem>>) attributes {dimension_semantics = [#tpu.dimension_semantics<parallel>], iteration_bounds = array<i64: 2>, scalar_prefetch = 0 : i64, scratch_operands = 0 : i64, tpu.core_type = #tpu.core_type<tc>, window_params = [{transform_indices = @transform_0, window_bounds = array<i64: 1, 8, 256>}, {pipeline_mode = #tpu.pipeline_mode<synchronous>, transform_indices = @transform_1, window_bounds = array<i64: 1, 256>}, {pipeline_mode = #tpu.pipeline_mode<synchronous>, transform_indices = @transform_2, window_bounds = array<i64: 1, 256>}, {pipeline_mode = #tpu.pipeline_mode<synchronous>, transform_indices = @transform_3, window_bounds = array<i64: 256, 64>}, {pipeline_mode = #tpu.pipeline_mode<synchronous>, transform_indices = @transform_4, window_bounds = array<i64: 128, 64>}, {pipeline_mode = #tpu.pipeline_mode<synchronous>, transform_indices = @transform_5, window_bounds = array<i64: 128, 64>}, {pipeline_mode = #tpu.pipeline_mode<synchronous>, transform_indices = @transform_6, window_bounds = array<i64: 1, 64>}, {transform_indices = @transform_7, window_bounds = array<i64: 1, 8, 64>}]} {
    %c0 = arith.constant 0 : index
    %c0_0 = arith.constant 0 : index
    %c0_1 = arith.constant 0 : index
    %0 = vector.load %arg1[%c0, %c0_0, %c0_1] : memref<1x8x256xbf16, #tpu.memory_space<vmem>>, vector<1x8x256xbf16>
    %1 = vector.shape_cast %0 : vector<1x8x256xbf16> to vector<8x256xbf16>
    %2 = arith.extf %1 : vector<8x256xbf16> to vector<8x256xf32>
    %c0_2 = arith.constant 0 : index
    %c0_3 = arith.constant 0 : index
    %3 = vector.load %arg2[%c0_2, %c0_3] : memref<1x256xf32, #tpu.memory_space<vmem>>, vector<1x256xf32>
    %4 = vector.broadcast %3 : vector<1x256xf32> to vector<8x256xf32>
    %5 = arith.mulf %2, %4 : vector<8x256xf32>
    %c0_4 = arith.constant 0 : index
    %c0_5 = arith.constant 0 : index
    %6 = vector.load %arg3[%c0_4, %c0_5] : memref<1x256xf32, #tpu.memory_space<vmem>>, vector<1x256xf32>
    %7 = vector.broadcast %6 : vector<1x256xf32> to vector<8x256xf32>
    %8 = arith.addf %5, %7 : vector<8x256xf32>
    %9 = arith.truncf %8 : vector<8x256xf32> to vector<8x256xbf16>
    %cst = arith.constant 0.000000e+00 : bf16
    %10 = vector.broadcast %cst : bf16 to vector<1x256xbf16>
    %11 = tpu.concatenate %10, %9, %10 in 0 : vector<1x256xbf16>, vector<8x256xbf16>, vector<1x256xbf16> -> vector<10x256xbf16>
    %12 = vector.extract_strided_slice %11 {offsets = [1, 0], sizes = [8, 256], strides = [1, 1]} : vector<10x256xbf16> to vector<8x256xbf16>
    %c0_6 = arith.constant 0 : index
    %c0_7 = arith.constant 0 : index
    %13 = vector.load %arg4[%c0_6, %c0_7] : memref<256x64xbf16, #tpu.memory_space<vmem>>, vector<256x64xbf16>
    %cst_8 = arith.constant dense<0.000000e+00> : vector<8x64xf32>
    %14 = tpu.matmul %12, %13, %cst_8 {dimension_numbers = #tpu.dot_dimension_numbers<[1], [0], [0], [1], [0, 0, 1, 1], [], []>} : vector<8x256xbf16>, vector<256x64xbf16>, vector<8x64xf32> -> vector<8x64xf32>
    %15 = vector.extract_strided_slice %11 {offsets = [0, 128], sizes = [8, 128], strides = [1, 1]} : vector<10x256xbf16> to vector<8x128xbf16>
    %c0_9 = arith.constant 0 : index
    %c0_10 = arith.constant 0 : index
    %16 = vector.load %arg5[%c0_9, %c0_10] : memref<128x64xbf16, #tpu.memory_space<vmem>>, vector<128x64xbf16>
    %cst_11 = arith.constant dense<0.000000e+00> : vector<8x64xf32>
    %17 = tpu.matmul %15, %16, %cst_11 {dimension_numbers = #tpu.dot_dimension_numbers<[1], [0], [0], [1], [0, 0, 1, 1], [], []>} : vector<8x128xbf16>, vector<128x64xbf16>, vector<8x64xf32> -> vector<8x64xf32>
    %18 = arith.addf %14, %17 : vector<8x64xf32>
    %19 = vector.extract_strided_slice %11 {offsets = [2, 0], sizes = [8, 128], strides = [1, 1]} : vector<10x256xbf16> to vector<8x128xbf16>
    %c0_12 = arith.constant 0 : index
    %c0_13 = arith.constant 0 : index
    %20 = vector.load %arg6[%c0_12, %c0_13] : memref<128x64xbf16, #tpu.memory_space<vmem>>, vector<128x64xbf16>
    %cst_14 = arith.constant dense<0.000000e+00> : vector<8x64xf32>
    %21 = tpu.matmul %19, %20, %cst_14 {dimension_numbers = #tpu.dot_dimension_numbers<[1], [0], [0], [1], [0, 0, 1, 1], [], []>} : vector<8x128xbf16>, vector<128x64xbf16>, vector<8x64xf32> -> vector<8x64xf32>
    %22 = arith.addf %18, %21 : vector<8x64xf32>
    %c0_15 = arith.constant 0 : index
    %c0_16 = arith.constant 0 : index
    %23 = vector.load %arg7[%c0_15, %c0_16] : memref<1x64xf32, #tpu.memory_space<vmem>>, vector<1x64xf32>
    %24 = vector.broadcast %23 : vector<1x64xf32> to vector<8x64xf32>
    %25 = arith.addf %22, %24 : vector<8x64xf32>
    %c0_17 = arith.constant 0 : index
    %c0_18 = arith.constant 0 : index
    %c0_19 = arith.constant 0 : index
    %26 = vector.load %arg8[%c0_17, %c0_18, %c0_19] : memref<1x8x64xf32, #tpu.memory_space<vmem>>, vector<1x8x64xf32>
    %27 = vector.shape_cast %26 : vector<1x8x64xf32> to vector<8x64xf32>
    %28 = vector.shape_cast %25 : vector<8x64xf32> to vector<1x8x64xf32>
    tpu.vector_store %arg8[%c0_17, %c0_18, %c0_19], %28 {strides = array<i32>} : memref<1x8x64xf32, #tpu.memory_space<vmem>>, vector<1x8x64xf32>,
    return
  }
  func.func @transform_0(%arg0: i32) -> (i32, i32, i32) {
    %c0_i32 = arith.constant 0 : i32
    %c0_i32_0 = arith.constant 0 : i32
    %c0_i32_1 = arith.constant 0 : i32
    return %arg0, %c0_i32, %c0_i32_0 : i32, i32, i32
  }
  func.func @transform_1(%arg0: i32) -> (i32, i32) {
    %c0_i32 = arith.constant 0 : i32
    %c0_i32_0 = arith.constant 0 : i32
    %c0_i32_1 = arith.constant 0 : i32
    return %c0_i32, %c0_i32_0 : i32, i32
  }
  func.func @transform_2(%arg0: i32) -> (i32, i32) {
    %c0_i32 = arith.constant 0 : i32
    %c0_i32_0 = arith.constant 0 : i32
    %c0_i32_1 = arith.constant 0 : i32
    return %c0_i32, %c0_i32_0 : i32, i32
  }
  func.func @transform_3(%arg0: i32) -> (i32, i32) {
    %c0_i32 = arith.constant 0 : i32
    %c0_i32_0 = arith.constant 0 : i32
    %c0_i32_1 = arith.constant 0 : i32
    return %c0_i32, %c0_i32_0 : i32, i32
  }
  func.func @transform_4(%arg0: i32) -> (i32, i32) {
    %c0_i32 = arith.constant 0 : i32
    %c0_i32_0 = arith.constant 0 : i32
    %c0_i32_1 = arith.constant 0 : i32
    return %c0_i32, %c0_i32_0 : i32, i32
  }
  func.func @transform_5(%arg0: i32) -> (i32, i32) {
    %c0_i32 = arith.constant 0 : i32
    %c0_i32_0 = arith.constant 0 : i32
    %c0_i32_1 = arith.constant 0 : i32
    return %c0_i32, %c0_i32_0 : i32, i32
  }
  func.func @transform_6(%arg0: i32) -> (i32, i32) {
    %c0_i32 = arith.constant 0 : i32
    %c0_i32_0 = arith.constant 0 : i32
    %c0_i32_1 = arith.constant 0 : i32
    return %c0_i32, %c0_i32_0 : i32, i32
  }
  func.func @transform_7(%arg0: i32) -> (i32, i32, i32) {
    %c0_i32 = arith.constant 0 : i32
    %c0_i32_0 = arith.constant 0 : i32
    %c0_i32_1 = arith.constant 0 : i32
    return %arg0, %c0_i32, %c0_i32_0 : i32, i32, i32
  }
}

</mosaic_0001>

<llo_original>
// kernel: tile.23
$region0: #{tile.23}
  #allocation0 [shape = 's32[1]{0}', space=sflag, size = 0x4, scoped, tag = 'scoped memory for tile.23']
  %s0 = inlined_call_operand.vmem [shape: f32[8], index: 0, kind: input, shape index: {}]
  %s1 = inlined_call_operand.vmem [shape: f32[16,8], index: 1, kind: output, shape index: {}]
  // Predicated region
  $region2: #{tile.23} parent=0 // pred_check
    _
  $region3: #{tile.23} parent=0 // pred_check_branch
    %3 = sbr.rel (0) target = $region5
  $region4: #{tile.23} parent=0 // pred_region
    _
  $region5: #{tile.23} parent=0 // pred_fallthru
    _
  %v4 = vld [vmem:[%s0] ss:$0 sm:$0xff]
  %5 = vst [vmem:[%s1] sm:$0xff] %v4
  %s6 = scalar_lea.vmem %s1, 8
  %7 = vst [vmem:[%s6] sm:$0xff] %v4

// kernel: tile.24
$region0: #{tile.24}
  %s0 = inlined_call_operand.vmem [shape: f32[16,8], index: 0, kind: input, shape index: {}]
  %s1 = inlined_call_operand.vmem [shape: f32[1,128], index: 1, kind: output, shape index: {}]
  $region1: #{tile.24} parent=0
    #allocation0 [shape = 'u8[4096]{0}', space=vmem, size = 0x1000, scoped, tag = 'scoped mem for output reshape']
    %v2 = vld [vmem:[%s0] sm:$0x1]
    %vm3 = vcmask 64512
    %4 = vst.msk [vmem:[#allocation0] sm:$0x1] %vm3, %v2
    %s5 = scalar_lea.vmem %s0, 15
    %v6 = vld [vmem:[%s5] sm:$0x1]
    %7 = vrot.lane.b32.xlu0 %v6, 120
    %v8 = vpop.permute.xlu0 %7
    %vm9 = vcmask 1048512
    %10 = vst.msk [vmem:[#allocation0] sm:$0x1] %vm9, %v8
    %s11 = scalar_lea.vmem %s0, 14
    %v12 = vld [vmem:[%s11] sm:$0x1]
    %13 = vrot.lane.b32.xlu0 %v12, 112
    %v14 = vpop.permute.xlu0 %13
    %vm15 = vcmask 982912
    %16 = vst.msk [vmem:[#allocation0] sm:$0x1] %vm15, %v14
    %s17 = scalar_lea.vmem %s0, 13
    %v18 = vld [vmem:[%s17] sm:$0x1]
    %19 = vrot.lane.b32.xlu0 %v18, 104
    %v20 = vpop.permute.xlu0 %19
    %vm21 = vcmask 917312
    %22 = vst.msk [vmem:[#allocation0] sm:$0x1] %vm21, %v20
    %s23 = scalar_lea.vmem %s0, 12
    %v24 = vld [vmem:[%s23] sm:$0x1]
    %25 = vrot.lane.b32.xlu0 %v24, 96
    %v26 = vpop.permute.xlu0 %25
    %vm27 = vcmask 851712
    %28 = vst.msk [vmem:[#allocation0] sm:$0x1] %vm27, %v26
    %s29 = scalar_lea.vmem %s0, 11
    %v30 = vld [vmem:[%s29] sm:$0x1]
    %31 = vrot.lane.b32.xlu0 %v30, 88
    %v32 = vpop.permute.xlu0 %31
    %vm33 = vcmask 786112
    %34 = vst.msk [vmem:[#allocation0] sm:$0x1] %vm33, %v32
    %s35 = scalar_lea.vmem %s0, 10
    %v36 = vld [vmem:[%s35] sm:$0x1]
    %37 = vrot.lane.b32.xlu0 %v36, 80
    %v38 = vpop.permute.xlu0 %37
    %vm39 = vcmask 720512
    %40 = vst.msk [vmem:[#allocation0] sm:$0x1] %vm39, %v38
    %s41 = scalar_lea.vmem %s0, 9
    %v42 = vld [vmem:[%s41] sm:$0x1]
    %43 = vrot.lane.b32.xlu0 %v42, 72
    %v44 = vpop.permute.xlu0 %43
    %vm45 = vcmask 654912
    %46 = vst.msk [vmem:[#allocation0] sm:$0x1] %vm45, %v44
    %s47 = scalar_lea.vmem %s0, 8
    %v48 = vld [vmem:[%s47] sm:$0x1]
    %49 = vrot.lane.b32.xlu0 %v48, 64
    %v50 = vpop.permute.xlu0 %49
    %vm51 = vcmask 589312
    %52 = vst.msk [vmem:[#allocation0] sm:$0x1] %vm51, %v50
    %s53 = scalar_lea.vmem %s0, 7
    %v54 = vld [vmem:[%s53] sm:$0x1]
    %55 = vrot.lane.b32.xlu0 %v54, 56
    %v56 = vpop.permute.xlu0 %55
    %vm57 = vcmask 523712
    %58 = vst.msk [vmem:[#allocation0] sm:$0x1] %vm57, %v56
    %s59 = scalar_lea.vmem %s0, 6
    %v60 = vld [vmem:[%s59] sm:$0x1]
    %61 = vrot.lane.b32.xlu0 %v60, 48
    %v62 = vpop.permute.xlu0 %61
    %vm63 = vcmask 458112
    %64 = vst.msk [vmem:[#allocation0] sm:$0x1] %vm63, %v62
    %s65 = scalar_lea.vmem %s0, 5
    %v66 = vld [vmem:[%s65] sm:$0x1]
    %67 = vrot.lane.b32.xlu0 %v66, 40
    %v68 = vpop.permute.xlu0 %67
    %vm69 = vcmask 392512
    %70 = vst.msk [vmem:[#allocation0] sm:$0x1] %vm69, %v68
    %s71 = scalar_lea.vmem %s0, 4
    %v72 = vld [vmem:[%s71] sm:$0x1]
    %73 = vrot.lane.b32.xlu0 %v72, 32
    %v74 = vpop.permute.xlu0 %73
    %vm75 = vcmask 326912
    %76 = vst.msk [vmem:[#allocation0] sm:$0x1] %vm75, %v74
    %s77 = scalar_lea.vmem %s0, 3
    %v78 = vld [vmem:[%s77] sm:$0x1]
    %79 = vrot.lane.b32.xlu0 %v78, 24
    %v80 = vpop.permute.xlu0 %79
    %vm81 = vcmask 261312
    %82 = vst.msk [vmem:[#allocation0] sm:$0x1] %vm81, %v80
    %s83 = scalar_lea.vmem %s0, 2
    %v84 = vld [vmem:[%s83] sm:$0x1]
    %85 = vrot.lane.b32.xlu0 %v84, 16
    %v86 = vpop.permute.xlu0 %85
    %vm87 = vcmask 195712
    %88 = vst.msk [vmem:[#allocation0] sm:$0x1] %vm87, %v86
    %s89 = scalar_lea.vmem %s0, 1
    %v90 = vld [vmem:[%s89] sm:$0x1]
    %91 = vrot.lane.b32.xlu0 %v90, 8
    %v92 = vpop.permute.xlu0 %91
    %vm93 = vcmask 130112
    %94 = vst.msk [vmem:[#allocation0] sm:$0x1] %vm93, %v92
    %s96 = sshll.u32 1, 1
    %s97 = ssub.s32 %s96, 1
    %v99 = vld [vmem:[#allocation0] sm:%s97]
    %s100 = sshll.u32 1, 1
    %s101 = ssub.s32 %s100, 1
    %102 = vst [vmem:[%s1] sm:%s101] %v99

// kernel: block_forward.2
$region0: #{block_forward.2}
  #allocation0 [shape = 'u32[]', space=smem, size = 0x4, offset = 0x4, fixed_abs, tag = 'smem constant byte address 0x4 - core index']
  #allocation1 [shape = 'u32[144,128]{1,0:T(1,128)}', space=vmem, size = 0x12000, scoped, tag = 'internal scratch']
  %s0 = inlined_call_operand.vmem [shape: bf16[2,18,64], index: 0, kind: input, shape index: {}]
  %s1 = inlined_call_operand.vmem [shape: bf16[3,64,128], index: 1, kind: input, shape index: {}]
  %s2 = inlined_call_operand.vmem [shape: f32[1,128], index: 2, kind: input, shape index: {}]
  %s3 = inlined_call_operand.vmem [shape: bf16[2,16,128], index: 3, kind: output, shape index: {0}]
  %s4 = inlined_call_operand.vmem [shape: f32[2,1,128], index: 4, kind: output, shape index: {1}]
  %s5 = inlined_call_operand.vmem [shape: f32[2,1,128], index: 5, kind: output, shape index: {2}]
  %6 = xla_tuple %s3, %s4, %s5
  %s7 = sld [smem:[#allocation0]]
  $region61: #{block_forward.2} parent=0
    _
  %s9 = ssub.s32 1, %s7
  %s10 = scalar_select 0, %s9, %s7
  loop: start=0, step=1, limit=4
  $region2: #{block_forward.2} parent=0 // loop_pre_header
    _
  $region3: #{block_forward.2} parent=0 // loop_header
    %s12 = sphi 0, %s16
    %p13 = scmp.ge.s32.totalorder %s12, 4
    %s22 = sphi 0, %s24
    %s25 = sphi 0, %s22
    %s26 = sphi 0, %s25
    %s42 = sphi 0, %s26
    %s46 = sphi 0, %s46
    %s48 = sphi 0, %s46
    %s49 = sphi 0, %s48
    %s63 = sphi 0, %s49
    %s67 = sphi 0, %s67
    %s69 = sphi 0, %s67
    %s70 = sphi 0, %s69
    %s84 = sphi 0, %s70
    %s90 = sphi 0, %s92
    %s93 = sphi 0, %s90
    %s94 = sphi 0, %s93
    %s110 = sphi 0, %s94
    %s116 = sphi 0, %s118
    %s119 = sphi 0, %s116
    %s120 = sphi 0, %s119
    %s136 = sphi 0, %s120
    %s142 = sphi 0, %s144
    %s145 = sphi 0, %s142
    %s146 = sphi 0, %s145
    %s162 = sphi 0, %s146
  $region4: #{block_forward.2} parent=0 // loop_header_branch
    %15 = sbr.rel (%p13) target = $region8
  $region5: #{block_forward.2} parent=0 // loop_body
    %s17 = ssub.s32 %s12, 1
    %s18 = ssub.s32 %s12, 2
    %s19 = sadd.s32 %s12, 1
    %s20 = ssub.s32 %s12, %s19
    %p21 = scmp.eq.s32.totalorder %s20, 0
    %s23 = sadd.s32 %s22, 1
    %s24 = scalar_select %p21, %s22, %s23
    %p27 = pneg %p21
    %p28 = scmp.eq.s32.totalorder %s12, 1
    %p29 = por %p27, %p28
    %p30 = scmp.ne.s32.totalorder %s22, %s25
    %p31 = scmp.eq.s32.totalorder %s12, 0
    %p32 = por %p30, %p31
    %p33 = scmp.ne.s32.totalorder %s22, %s25
    %p34 = scmp.eq.s32.totalorder %s17, 1
    %p35 = por %p33, %p34
    %p36 = scmp.ne.s32.totalorder %s25, %s26
    %p37 = scmp.eq.s32.totalorder %s17, 0
    %p38 = por %p36, %p37
    %p39 = scmp.ne.s32.totalorder %s25, %s26
    %p40 = scmp.eq.s32.totalorder %s18, 1
    %p41 = por %p39, %p40
    %p43 = scmp.ne.s32.totalorder %s26, %s42
    %p44 = scmp.eq.s32.totalorder %s18, 0
    %p45 = por %p43, %p44
    %s47 = sadd.s32 %s46, 1
    %p50 = scmp.eq.s32.totalorder %s12, 1
    %p51 = scmp.ne.s32.totalorder %s46, %s48
    %p52 = scmp.eq.s32.totalorder %s12, 0
    %p53 = por %p51, %p52
    %p54 = scmp.ne.s32.totalorder %s46, %s48
    %p55 = scmp.eq.s32.totalorder %s17, 1
    %p56 = por %p54, %p55
    %p57 = scmp.ne.s32.totalorder %s48, %s49
    %p58 = scmp.eq.s32.totalorder %s17, 0
    %p59 = por %p57, %p58
    %p60 = scmp.ne.s32.totalorder %s48, %s49
    %p61 = scmp.eq.s32.totalorder %s18, 1
    %p62 = por %p60, %p61
    %p64 = scmp.ne.s32.totalorder %s49, %s63
    %p65 = scmp.eq.s32.totalorder %s18, 0
    %p66 = por %p64, %p65
    %s68 = sadd.s32 %s67, 1
    %p71 = scmp.eq.s32.totalorder %s12, 1
    %p72 = scmp.ne.s32.totalorder %s67, %s69
    %p73 = scmp.eq.s32.totalorder %s12, 0
    %p74 = por %p72, %p73
    %p75 = scmp.ne.s32.totalorder %s67, %s69
    %p76 = scmp.eq.s32.totalorder %s17, 1
    %p77 = por %p75, %p76
    %p78 = scmp.ne.s32.totalorder %s69, %s70
    %p79 = scmp.eq.s32.totalorder %s17, 0
    %p80 = por %p78, %p79
    %p81 = scmp.ne.s32.totalorder %s69, %s70
    %p82 = scmp.eq.s32.totalorder %s18, 1
    %p83 = por %p81, %p82
    %p85 = scmp.ne.s32.totalorder %s70, %s84
    %p86 = scmp.eq.s32.totalorder %s18, 0
    %p87 = por %p85, %p86
    %s88 = ssub.s32 %s12, %s19
    %p89 = scmp.eq.s32.totalorder %s88, 0
    %s91 = sadd.s32 %s90, 1
    %s92 = scalar_select %p89, %s90, %s91
    %p95 = pneg %p89
    %p96 = scmp.eq.s32.totalorder %s12, 1
    %p97 = por %p95, %p96
    %p98 = scmp.ne.s32.totalorder %s90, %s93
    %p99 = scmp.eq.s32.totalorder %s12, 0
    %p100 = por %p98, %p99
    %p101 = scmp.ne.s32.totalorder %s90, %s93
    %p102 = scmp.eq.s32.totalorder %s17, 1
    %p103 = por %p101, %p102
    %p104 = scmp.ne.s32.totalorder %s93, %s94
    %p105 = scmp.eq.s32.totalorder %s17, 0
    %p106 = por %p104, %p105
    %p107 = scmp.ne.s32.totalorder %s93, %s94
    %p108 = scmp.eq.s32.totalorder %s18, 1
    %p109 = por %p107, %p108
    %p111 = scmp.ne.s32.totalorder %s94, %s110
    %p112 = scmp.eq.s32.totalorder %s18, 0
    %p113 = por %p111, %p112
    %s114 = ssub.s32 %s12, %s19
    %p115 = scmp.eq.s32.totalorder %s114, 0
    %s117 = sadd.s32 %s116, 1
    %s118 = scalar_select %p115, %s116, %s117
    %p121 = pneg %p115
    %p122 = scmp.eq.s32.totalorder %s12, 1
    %p123 = por %p121, %p122
    %p124 = scmp.ne.s32.totalorder %s116, %s119
    %p125 = scmp.eq.s32.totalorder %s12, 0
    %p126 = por %p124, %p125
    %p127 = scmp.ne.s32.totalorder %s116, %s119
    %p128 = scmp.eq.s32.totalorder %s17, 1
    %p129 = por %p127, %p128
    %p130 = scmp.ne.s32.totalorder %s119, %s120
    %p131 = scmp.eq.s32.totalorder %s17, 0
    %p132 = por %p130, %p131
    %p133 = scmp.ne.s32.totalorder %s119, %s120
    %p134 = scmp.eq.s32.totalorder %s18, 1
    %p135 = por %p133, %p134
    %p137 = scmp.ne.s32.totalorder %s120, %s136
    %p138 = scmp.eq.s32.totalorder %s18, 0
    %p139 = por %p137, %p138
    %s140 = ssub.s32 %s12, %s19
    %p141 = scmp.eq.s32.totalorder %s140, 0
    %s143 = sadd.s32 %s142, 1
    %s144 = scalar_select %p141, %s142, %s143
    %p147 = pneg %p141
    %p148 = scmp.eq.s32.totalorder %s12, 1
    %p149 = por %p147, %p148
    %p150 = scmp.ne.s32.totalorder %s142, %s145
    %p151 = scmp.eq.s32.totalorder %s12, 0
    %p152 = por %p150, %p151
    %p153 = scmp.ne.s32.totalorder %s142, %s145
    %p154 = scmp.eq.s32.totalorder %s17, 1
    %p155 = por %p153, %p154
    %p156 = scmp.ne.s32.totalorder %s145, %s146
    %p157 = scmp.eq.s32.totalorder %s17, 0
    %p158 = por %p156, %p157
    %p159 = scmp.ne.s32.totalorder %s145, %s146
    %p160 = scmp.eq.s32.totalorder %s18, 1
    %p161 = por %p159, %p160
    %p163 = scmp.ne.s32.totalorder %s146, %s162
    %p164 = scmp.eq.s32.totalorder %s18, 0
    %p165 = por %p163, %p164
    %p166 = scmp.le.s32.totalorder 1, %s12
    %p167 = scmp.lt.s32.totalorder %s12, 3
    %p168 = pnand %p166, %p167
    %p169 = pneg %p168
    // Predicated region
    $region9: #{block_forward.2} parent=5 // pred_check
      _
    $region10: #{block_forward.2} parent=5 // pred_check_branch
      %171 = sbr.rel (%p168) target = $region12
    $region11: #{block_forward.2} parent=5 // pred_region
      %s172 = ssub.s32 %s12, 1
      // Predicated region
      $region13: #{block_forward.2} parent=11 // pred_check
        %p173 = pneg %p59
      $region14: #{block_forward.2} parent=11 // pred_check_branch
        %175 = sbr.rel (%p173) target = $region16
      $region15: #{block_forward.2} parent=11 // pred_region
        _
      $region16: #{block_forward.2} parent=11 // pred_fallthru
        _
      // Predicated region
      $region17: #{block_forward.2} parent=11 // pred_check
        %p176 = pneg %p80
      $region18: #{block_forward.2} parent=11 // pred_check_branch
        %178 = sbr.rel (%p176) target = $region20
      $region19: #{block_forward.2} parent=11 // pred_region
        _
      $region20: #{block_forward.2} parent=11 // pred_fallthru
        _
    $region12: #{block_forward.2} parent=5 // pred_fallthru
      _
    %p179 = scmp.lt.s32.totalorder %s12, 2
    // Predicated region
    $region21: #{block_forward.2} parent=5 // pred_check
      %p180 = pneg %p179
    $region22: #{block_forward.2} parent=5 // pred_check_branch
      %182 = sbr.rel (%p180) target = $region24
    $region23: #{block_forward.2} parent=5 // pred_region
      // Predicated region
      $region25: #{block_forward.2} parent=23 // pred_check
        %p183 = pneg %p32
      $region26: #{block_forward.2} parent=23 // pred_check_branch
        %185 = sbr.rel (%p183) target = $region28
      $region27: #{block_forward.2} parent=23 // pred_region
        %p186 = scmp.lt.s32.totalorder %s12, 1
        %s187 = scalar_select %p186, %s12, 1
        %s188 = smul.addr %s187, 3
        %s189 = smul.addr %s188, 4
        %s190 = scalar_lea.vmem %s0, %s189
      $region28: #{block_forward.2} parent=23 // pred_fallthru
        _
    $region24: #{block_forward.2} parent=5 // pred_fallthru
      _
    %p191 = scmp.le.s32.totalorder 1, %s12
    %p192 = scmp.lt.s32.totalorder %s12, 3
    %p193 = pnand %p191, %p192
    %p194 = pneg %p193
    // Predicated region
    $region29: #{block_forward.2} parent=5 // pred_check
      _
    $region30: #{block_forward.2} parent=5 // pred_check_branch
      %196 = sbr.rel (%p193) target = $region32
    $region31: #{block_forward.2} parent=5 // pred_region
      %s197 = ssub.s32 %s12, 1
      %p198 = scmp.lt.s32.totalorder %s17, 1
      %s199 = scalar_select %p198, %s17, 1
      %s200 = smul.addr %s199, 3
      %s201 = smul.addr %s200, 4
      %s202 = scalar_lea.vmem %s0, %s201
      %p203 = pneg %p38
      %p204 = pneg %p35
      %p205 = pneg %p59
      %p206 = pneg %p56
      %p207 = pneg %p80
      %p208 = pneg %p77
      %p209 = pneg %p106
      %p210 = pneg %p103
      %p211 = scmp.lt.s32.totalorder %s17, 1
      %s212 = scalar_select %p211, %s17, 1
      %s213 = smul.addr %s212, 2
      %s214 = smul.addr %s213, 4
      %s215 = scalar_lea.vmem %s3, %s214
      %p216 = pneg %p132
      %p217 = pneg %p129
      %p218 = scmp.lt.s32.totalorder %s17, 1
      %s219 = scalar_select %p218, %s17, 1
      %s220 = scalar_lea.vmem %s4, %s219
      %p221 = pneg %p158
      %p222 = pneg %p155
      %p223 = scmp.lt.s32.totalorder %s17, 1
      %s224 = scalar_select %p223, %s17, 1
      %s225 = scalar_lea.vmem %s5, %s224
      %p226 = scmp.lt.s32.totalorder %s17, 1
      %s227 = scalar_select %p226, %s17, 1
      %s228 = smul.addr %s227, 3
      %s229 = smul.addr %s228, 4
      %s230 = scalar_lea.vmem %s0, %s229
      %p231 = scmp.lt.s32.totalorder %s17, 1
      %s232 = scalar_select %p231, %s17, 1
      %s233 = smul.addr %s232, 2
      %s234 = smul.addr %s233, 4
      %s235 = scalar_lea.vmem %s3, %s234
      %p236 = scmp.lt.s32.totalorder %s17, 1
      %s237 = scalar_select %p236, %s17, 1
      %s238 = scalar_lea.vmem %s4, %s237
      %p239 = scmp.lt.s32.totalorder %s17, 1
      %s240 = scalar_select %p239, %s17, 1
      %s241 = scalar_lea.vmem %s5, %s240
      %v243 = vld [vmem:[%s230] sm:$0xf]
      %v244 = vld [vmem:[%s230 + $0x4] sm:$0xf]
      %v245 = vld [vmem:[%s230 + $0x8] sm:$0x1]
      %v246 = vld [vmem:[%s1] sm:$0xf]
      %v247 = vld [vmem:[%s1 + $0x4] sm:$0xf]
      %v248 = vld [vmem:[%s1 + $0x8] sm:$0xf]
      %v249 = vld [vmem:[%s1 + $0xc] sm:$0xf]
      %v250 = vld [vmem:[%s1 + $0x10] sm:$0xf]
      %v251 = vld [vmem:[%s1 + $0x14] sm:$0xf]
      %v252 = vld [vmem:[%s1 + $0x18] sm:$0xf]
      %v253 = vld [vmem:[%s1 + $0x1c] sm:$0xf]
      %s254 = scalar_lea.vmem %s1, 32
      %v255 = vld [vmem:[%s254] sm:$0xf]
      %v256 = vld [vmem:[%s254 + $0x4] sm:$0xf]
      %v257 = vld [vmem:[%s254 + $0x8] sm:$0xf]
      %v258 = vld [vmem:[%s254 + $0xc] sm:$0xf]
      %v259 = vld [vmem:[%s254 + $0x10] sm:$0xf]
      %v260 = vld [vmem:[%s254 + $0x14] sm:$0xf]
      %v261 = vld [vmem:[%s254 + $0x18] sm:$0xf]
      %v262 = vld [vmem:[%s254 + $0x1c] sm:$0xf]
      %v266 = vunpack.c.l.b16 %v243
      %v267 = vunpack.c.l.b16 %v244
      %v268 = vunpack.c.l.b16 %v245
      %v269 = vpack.c.b16 %v267, %v266
      %v270 = vpack.c.b16 %v268, %v268
      %vm271 = vsmask.f32 7424
      %v273 = vshrl.u32 %v269, 16
      %v275 = vshll.u32 %v269, 16
      %v277 = vrot.slane %v275, 1
      %v278 = vor.u32 %v273, %v277
      %v280 = vshll.u32 %v270, 16
      %v282 = vrot.slane %v280, 1
      %v283 = vsel %vm271, %v278, %v282
      %v292 = vunpack.c.l.b16 %v255
      %v293 = vunpack.c.l.b16 %v256
      %v294 = vunpack.c.l.b16 %v257
      %v295 = vunpack.c.l.b16 %v258
      %v296 = vunpack.c.l.b16 %v259
      %v297 = vunpack.c.l.b16 %v260
      %v298 = vunpack.c.l.b16 %v261
      %v299 = vunpack.c.l.b16 %v262
      %v300 = vpack.c.b16 %v293, %v292
      %v301 = vpack.c.b16 %v295, %v294
      %v302 = vpack.c.b16 %v297, %v296
      %v303 = vpack.c.b16 %v299, %v298
      %vm308 = vcmask 523264
      %v310 = vsel %vm308, %v283, 0
      %312 = vmatprep.subr.bf16.mxu0 0
      %313 = vmatpush1.bf16.msra.mxu0 0
      %314 = vmatprep.subr.bf16.mxu0 0
      %315 = vmatpush1.bf16.msra.mxu0 0
      %316 = vmatprep.subr.bf16.mxu0 0
      %317 = vmatpush1.bf16.msra.mxu0 0
      %318 = vmatprep.subr.bf16.mxu0 0
      %319 = vmatpush1.bf16.msra.mxu0 0
      %320 = vmatprep.subr.bf16.mxu0 0
      %321 = vmatpush1.bf16.msra.mxu0 %v303
      %322 = vmatprep.subr.bf16.mxu0 0
      %323 = vmatpush1.bf16.msra.mxu0 %v302
      %324 = vmatprep.subr.bf16.mxu0 0
      %325 = vmatpush1.bf16.msra.mxu0 %v301
      %326 = vmatprep.subr.bf16.mxu0 0
      %327 = vmatpush1.bf16.msra.mxu0 %v300
      %328 = vmatprep.subr.bf16.mxu0 0
      %329 = vmatpush2.bf16.msra.mxu0 0
      %330 = vmatprep.subr.bf16.mxu0 0
      %331 = vmatpush2.bf16.msra.mxu0 0
      %332 = vmatprep.subr.bf16.mxu0 0
      %333 = vmatpush2.bf16.msra.mxu0 0
      %334 = vmatprep.subr.bf16.mxu0 0
      %335 = vmatpush2.bf16.msra.mxu0 0
      %336 = vmatprep.subr.bf16.mxu0 0
      %337 = vmatpush2.bf16.msra.mxu0 0
      %338 = vmatprep.subr.bf16.mxu0 0
      %339 = vmatpush2.bf16.msra.mxu0 0
      %340 = vmatprep.subr.bf16.mxu0 0
      %341 = vmatpush2.bf16.msra.mxu0 0
      %342 = vmatprep.subr.bf16.mxu0 0
      %343 = vmatpush2.bf16.msra.mxu0 0
      %344 = vmatprep.mubr.bf16.mxu0 0
      %345 = vmatmul.mubr.bf16.gmra.mxu0 %v310
      %v346 = vpop.f32.mrf.mxu0
      %v347 = vadd.f32 0.0, %v346
      %v348 = vpop.f32.mrf.mxu0
      %v349 = vpop.f32.mrf.mxu0
      %v350 = vadd.f32 0.0, %v349
      %v351 = vpop.f32.mrf.mxu0
      %352 = vdwg.mxu0
      %v361 = vunpack.c.l.b16 %v246
      %v362 = vunpack.c.l.b16 %v247
      %v363 = vunpack.c.l.b16 %v248
      %v364 = vunpack.c.l.b16 %v249
      %v365 = vunpack.c.l.b16 %v250
      %v366 = vunpack.c.l.b16 %v251
      %v367 = vunpack.c.l.b16 %v252
      %v368 = vunpack.c.l.b16 %v253
      %v369 = vpack.c.b16 %v362, %v361
      %v370 = vpack.c.b16 %v364, %v363
      %v371 = vpack.c.b16 %v366, %v365
      %v372 = vpack.c.b16 %v368, %v367
      %v377 = vsel %vm308, %v269, 0
      %379 = vmatprep.subr.bf16.mxu0 0
      %380 = vmatpush1.bf16.msra.mxu0 0
      %381 = vmatprep.subr.bf16.mxu0 0
      %382 = vmatpush1.bf16.msra.mxu0 0
      %383 = vmatprep.subr.bf16.mxu0 0
      %384 = vmatpush1.bf16.msra.mxu0 0
      %385 = vmatprep.subr.bf16.mxu0 0
      %386 = vmatpush1.bf16.msra.mxu0 0
      %387 = vmatprep.subr.bf16.mxu0 0
      %388 = vmatpush1.bf16.msra.mxu0 %v372
      %389 = vmatprep.subr.bf16.mxu0 0
      %390 = vmatpush1.bf16.msra.mxu0 %v371
      %391 = vmatprep.subr.bf16.mxu0 0
      %392 = vmatpush1.bf16.msra.mxu0 %v370
      %393 = vmatprep.subr.bf16.mxu0 0
      %394 = vmatpush1.bf16.msra.mxu0 %v369
      %395 = vmatprep.subr.bf16.mxu0 0
      %396 = vmatpush2.bf16.msra.mxu0 0
      %397 = vmatprep.subr.bf16.mxu0 0
      %398 = vmatpush2.bf16.msra.mxu0 0
      %399 = vmatprep.subr.bf16.mxu0 0
      %400 = vmatpush2.bf16.msra.mxu0 0
      %401 = vmatprep.subr.bf16.mxu0 0
      %402 = vmatpush2.bf16.msra.mxu0 0
      %403 = vmatprep.subr.bf16.mxu0 0
      %404 = vmatpush2.bf16.msra.mxu0 0
      %405 = vmatprep.subr.bf16.mxu0 0
      %406 = vmatpush2.bf16.msra.mxu0 0
      %407 = vmatprep.subr.bf16.mxu0 0
      %408 = vmatpush2.bf16.msra.mxu0 0
      %409 = vmatprep.subr.bf16.mxu0 0
      %410 = vmatpush2.bf16.msra.mxu0 0
      %411 = vmatprep.mubr.bf16.mxu0 0
      %412 = vmatmul.mubr.bf16.gmra.mxu0 %v377
      %v413 = vpop.f32.mrf.mxu0
      %v414 = vadd.f32 %v347, %v413
      %v415 = vpop.f32.mrf.mxu0
      %v416 = vpop.f32.mrf.mxu0
      %v417 = vadd.f32 %v350, %v416
      %v418 = vpop.f32.mrf.mxu0
      %419 = vdwg.mxu0
      %s420 = scalar_lea.vmem %s1, 64
      %v421 = vld [vmem:[%s420] sm:$0xf]
      %v422 = vld [vmem:[%s420 + $0x4] sm:$0xf]
      %v423 = vld [vmem:[%s420 + $0x8] sm:$0xf]
      %v424 = vld [vmem:[%s420 + $0xc] sm:$0xf]
      %v425 = vld [vmem:[%s420 + $0x10] sm:$0xf]
      %v426 = vld [vmem:[%s420 + $0x14] sm:$0xf]
      %v427 = vld [vmem:[%s420 + $0x18] sm:$0xf]
      %v428 = vld [vmem:[%s420 + $0x1c] sm:$0xf]
      %vm429 = vcmask 1046528
      %v430 = vrot.slane %v269, 1
      %v431 = vrot.slane %v270, 1
      %v432 = vsel %vm429, %v430, %v431
      %v441 = vunpack.c.l.b16 %v421
      %v442 = vunpack.c.l.b16 %v422
      %v443 = vunpack.c.l.b16 %v423
      %v444 = vunpack.c.l.b16 %v424
      %v445 = vunpack.c.l.b16 %v425
      %v446 = vunpack.c.l.b16 %v426
      %v447 = vunpack.c.l.b16 %v427
      %v448 = vunpack.c.l.b16 %v428
      %v449 = vpack.c.b16 %v442, %v441
      %v450 = vpack.c.b16 %v444, %v443
      %v451 = vpack.c.b16 %v446, %v445
      %v452 = vpack.c.b16 %v448, %v447
      %v458 = vsel %vm308, %v432, 0
      %460 = vmatprep.subr.bf16.mxu0 0
      %461 = vmatpush1.bf16.msra.mxu0 0
      %462 = vmatprep.subr.bf16.mxu0 0
      %463 = vmatpush1.bf16.msra.mxu0 0
      %464 = vmatprep.subr.bf16.mxu0 0
      %465 = vmatpush1.bf16.msra.mxu0 0
      %466 = vmatprep.subr.bf16.mxu0 0
      %467 = vmatpush1.bf16.msra.mxu0 0
      %468 = vmatprep.subr.bf16.mxu0 0
      %469 = vmatpush1.bf16.msra.mxu0 %v452
      %470 = vmatprep.subr.bf16.mxu0 0
      %471 = vmatpush1.bf16.msra.mxu0 %v451
      %472 = vmatprep.subr.bf16.mxu0 0
      %473 = vmatpush1.bf16.msra.mxu0 %v450
      %474 = vmatprep.subr.bf16.mxu0 0
      %475 = vmatpush1.bf16.msra.mxu0 %v449
      %476 = vmatprep.subr.bf16.mxu0 0
      %477 = vmatpush2.bf16.msra.mxu0 0
      %478 = vmatprep.subr.bf16.mxu0 0
      %479 = vmatpush2.bf16.msra.mxu0 0
      %480 = vmatprep.subr.bf16.mxu0 0
      %481 = vmatpush2.bf16.msra.mxu0 0
      %482 = vmatprep.subr.bf16.mxu0 0
      %483 = vmatpush2.bf16.msra.mxu0 0
      %484 = vmatprep.subr.bf16.mxu0 0
      %485 = vmatpush2.bf16.msra.mxu0 0
      %486 = vmatprep.subr.bf16.mxu0 0
      %487 = vmatpush2.bf16.msra.mxu0 0
      %488 = vmatprep.subr.bf16.mxu0 0
      %489 = vmatpush2.bf16.msra.mxu0 0
      %490 = vmatprep.subr.bf16.mxu0 0
      %491 = vmatpush2.bf16.msra.mxu0 0
      %492 = vmatprep.mubr.bf16.mxu0 0
      %493 = vmatmul.mubr.bf16.gmra.mxu0 %v458
      %v494 = vpop.f32.mrf.mxu0
      %v495 = vadd.f32 0.0, %v494
      %v496 = vpop.f32.mrf.mxu0
      %v497 = vpop.f32.mrf.mxu0
      %v498 = vadd.f32 0.0, %v497
      %v499 = vpop.f32.mrf.mxu0
      %500 = vdwg.mxu0
      %v501 = vadd.f32 %v414, %v495
      %v502 = vadd.f32 %v417, %v498
      %v503 = vld [vmem:[%s2] sm:$0x1]
      %v505 = vlaneseq
      %v506 = vshrl.u32 %v505, 7
      %v507 = vsub.s32 0, %v506
      %v508 = vrot.slane %v503, %v507
      %v510 = vadd.f32 %v501, %v508
      %v511 = vadd.f32 %v502, %v508
      %v512 = vmax.f32 %v510, 0.0
      %v513 = vmax.f32 %v511, 0.0
      %v514 = vpack.c.bf16 %v513, %v512
      %v516 = vunpack.c.l.b16 %v514
      %v517 = vunpack.c.h.b16 %v514
      %v518 = vpack.c.b16 %v516, %v516
      %v519 = vpack.c.b16 %v517, %v517
      %522 = vst [vmem:[%s235] sm:$0xf] %v518
      %523 = vst [vmem:[%s235 + $0x4] sm:$0xf] %v519
      %v524 = vadd.f32 %v512, %v513
      %v525 = vrot.slane %v524, 4
      %v526 = vadd.f32 %v524, %v525
      %v527 = vrot.slane %v526, 2
      %v528 = vadd.f32 %v526, %v527
      %v529 = vrot.slane %v528, 1
      %v530 = vadd.f32 %v528, %v529
      %531 = vst [vmem:[%s238] sm:$0x1] %v530
      %v532 = vmul.f32 %v512, %v512
      %v533 = vmul.f32 %v513, %v513
      %v534 = vadd.f32 %v532, %v533
      %v535 = vrot.slane %v534, 4
      %v536 = vadd.f32 %v534, %v535
      %v537 = vrot.slane %v536, 2
      %v538 = vadd.f32 %v536, %v537
      %v539 = vrot.slane %v538, 1
      %v540 = vadd.f32 %v538, %v539
      %541 = vst [vmem:[%s241] sm:$0x1] %v540
      %p542 = scmp.lt.s32.totalorder %s17, 1
      %s543 = scalar_select %p542, %s17, 1
      %s544 = smul.addr %s543, 2
      %s545 = smul.addr %s544, 4
      %s546 = scalar_lea.vmem %s3, %s545
      %p547 = scmp.lt.s32.totalorder %s17, 1
      %s548 = scalar_select %p547, %s17, 1
      %s549 = scalar_lea.vmem %s4, %s548
      %p550 = scmp.lt.s32.totalorder %s17, 1
      %s551 = scalar_select %p550, %s17, 1
      %s552 = scalar_lea.vmem %s5, %s551
      // Predicated region
      $region33: #{block_forward.2} parent=31 // pred_check
        %p553 = pneg %p103
      $region34: #{block_forward.2} parent=31 // pred_check_branch
        %555 = sbr.rel (%p553) target = $region36
      $region35: #{block_forward.2} parent=31 // pred_region
        _
      $region36: #{block_forward.2} parent=31 // pred_fallthru
        _
      // Predicated region
      $region37: #{block_forward.2} parent=31 // pred_check
        %p556 = pneg %p129
      $region38: #{block_forward.2} parent=31 // pred_check_branch
        %558 = sbr.rel (%p556) target = $region40
      $region39: #{block_forward.2} parent=31 // pred_region
        _
      $region40: #{block_forward.2} parent=31 // pred_fallthru
        _
      // Predicated region
      $region41: #{block_forward.2} parent=31 // pred_check
        %p559 = pneg %p155
      $region42: #{block_forward.2} parent=31 // pred_check_branch
        %561 = sbr.rel (%p559) target = $region44
      $region43: #{block_forward.2} parent=31 // pred_region
        _
      $region44: #{block_forward.2} parent=31 // pred_fallthru
        _
    $region32: #{block_forward.2} parent=5 // pred_fallthru
      _
    %p562 = scmp.le.s32.totalorder 2, %s12
    // Predicated region
    $region45: #{block_forward.2} parent=5 // pred_check
      %p563 = pneg %p562
    $region46: #{block_forward.2} parent=5 // pred_check_branch
      %565 = sbr.rel (%p563) target = $region48
    $region47: #{block_forward.2} parent=5 // pred_region
      %s566 = ssub.s32 %s12, 2
      // Predicated region
      $region49: #{block_forward.2} parent=47 // pred_check
        %p567 = pneg %p109
      $region50: #{block_forward.2} parent=47 // pred_check_branch
        %569 = sbr.rel (%p567) target = $region52
      $region51: #{block_forward.2} parent=47 // pred_region
        %p570 = scmp.lt.s32.totalorder %s18, 1
        %s571 = scalar_select %p570, %s18, 1
        %s572 = smul.addr %s571, 2
        %s573 = smul.addr %s572, 4
        %s574 = scalar_lea.vmem %s3, %s573
      $region52: #{block_forward.2} parent=47 // pred_fallthru
        _
      // Predicated region
      $region53: #{block_forward.2} parent=47 // pred_check
        %p575 = pneg %p135
      $region54: #{block_forward.2} parent=47 // pred_check_branch
        %577 = sbr.rel (%p575) target = $region56
      $region55: #{block_forward.2} parent=47 // pred_region
        %p578 = scmp.lt.s32.totalorder %s18, 1
        %s579 = scalar_select %p578, %s18, 1
        %s580 = scalar_lea.vmem %s4, %s579
      $region56: #{block_forward.2} parent=47 // pred_fallthru
        _
      // Predicated region
      $region57: #{block_forward.2} parent=47 // pred_check
        %p581 = pneg %p161
      $region58: #{block_forward.2} parent=47 // pred_check_branch
        %583 = sbr.rel (%p581) target = $region60
      $region59: #{block_forward.2} parent=47 // pred_region
        %p584 = scmp.lt.s32.totalorder %s18, 1
        %s585 = scalar_select %p584, %s18, 1
        %s586 = scalar_lea.vmem %s5, %s585
      $region60: #{block_forward.2} parent=47 // pred_fallthru
        _
    $region48: #{block_forward.2} parent=5 // pred_fallthru
      _
  $region6: #{block_forward.2} parent=0 // loop_footer
    %s16 = sadd.s32 1, %s12
  $region7: #{block_forward.2} parent=0 // loop_footer_branch
    %11 = sbr.rel target = $region3
  $region8: #{block_forward.2} parent=0 // loop_exit
    _

// kernel: tile.33
$region0: #{tile.33}
  #allocation0 [shape = 's32[1]{0}', space=sflag, size = 0x4, scoped, tag = 'scoped memory for tile.33']
  %s0 = inlined_call_operand.vmem [shape: f32[8], index: 0, kind: input, shape index: {}]
  %s1 = inlined_call_operand.vmem [shape: f32[32,8], index: 1, kind: output, shape index: {}]
  // Predicated region
  $region2: #{tile.33} parent=0 // pred_check
    _
  $region3: #{tile.33} parent=0 // pred_check_branch
    %3 = sbr.rel (0) target = $region5
  $region4: #{tile.33} parent=0 // pred_region
    _
  $region5: #{tile.33} parent=0 // pred_fallthru
    _
  %v4 = vld [vmem:[%s0] ss:$0 sm:$0xff]
  %5 = vst [vmem:[%s1] sm:$0xff] %v4
  %s6 = scalar_lea.vmem %s1, 8
  %7 = vst [vmem:[%s6] sm:$0xff] %v4
  %s8 = scalar_lea.vmem %s1, 16
  %9 = vst [vmem:[%s8] sm:$0xff] %v4
  %s10 = scalar_lea.vmem %s1, 24
  %11 = vst [vmem:[%s10] sm:$0xff] %v4

// kernel: tile.34
$region0: #{tile.34}
  %s0 = inlined_call_operand.vmem [shape: f32[32,8], index: 0, kind: input, shape index: {}]
  %s1 = inlined_call_operand.vmem [shape: f32[1,256], index: 1, kind: output, shape index: {}]
  $region1: #{tile.34} parent=0
    #allocation0 [shape = 'u8[8192]{0}', space=vmem, size = 0x2000, scoped, tag = 'scoped mem for output reshape']
    %s2 = smov 3
    %v3 = vld [vmem:[%s0] ss:$16 sm:%s2]
    %vm4 = vcmask 64512
    %5 = vst.msk [vmem:[#allocation0] ss:$8 sm:$0x3] %vm4, %v3
    %s6 = scalar_lea.vmem %s0, 15
    %s7 = smov 3
    %v8 = vld [vmem:[%s6] ss:$16 sm:%s7]
    %9 = vrot.lane.b32.xlu0 %v8, 120
    %v10 = vpop.permute.xlu0 %9
    %vm11 = vcmask 1048512
    %12 = vst.msk [vmem:[#allocation0] ss:$8 sm:$0x3] %vm11, %v10
    %s13 = scalar_lea.vmem %s0, 14
    %s14 = smov 3
    %v15 = vld [vmem:[%s13] ss:$16 sm:%s14]
    %16 = vrot.lane.b32.xlu0 %v15, 112
    %v17 = vpop.permute.xlu0 %16
    %vm18 = vcmask 982912
    %19 = vst.msk [vmem:[#allocation0] ss:$8 sm:$0x3] %vm18, %v17
    %s20 = scalar_lea.vmem %s0, 13
    %s21 = smov 3
    %v22 = vld [vmem:[%s20] ss:$16 sm:%s21]
    %23 = vrot.lane.b32.xlu0 %v22, 104
    %v24 = vpop.permute.xlu0 %23
    %vm25 = vcmask 917312
    %26 = vst.msk [vmem:[#allocation0] ss:$8 sm:$0x3] %vm25, %v24
    %s27 = scalar_lea.vmem %s0, 12
    %s28 = smov 3
    %v29 = vld [vmem:[%s27] ss:$16 sm:%s28]
    %30 = vrot.lane.b32.xlu0 %v29, 96
    %v31 = vpop.permute.xlu0 %30
    %vm32 = vcmask 851712
    %33 = vst.msk [vmem:[#allocation0] ss:$8 sm:$0x3] %vm32, %v31
    %s34 = scalar_lea.vmem %s0, 11
    %s35 = smov 3
    %v36 = vld [vmem:[%s34] ss:$16 sm:%s35]
    %37 = vrot.lane.b32.xlu0 %v36, 88
    %v38 = vpop.permute.xlu0 %37
    %vm39 = vcmask 786112
    %40 = vst.msk [vmem:[#allocation0] ss:$8 sm:$0x3] %vm39, %v38
    %s41 = scalar_lea.vmem %s0, 10
    %s42 = smov 3
    %v43 = vld [vmem:[%s41] ss:$16 sm:%s42]
    %44 = vrot.lane.b32.xlu0 %v43, 80
    %v45 = vpop.permute.xlu0 %44
    %vm46 = vcmask 720512
    %47 = vst.msk [vmem:[#allocation0] ss:$8 sm:$0x3] %vm46, %v45
    %s48 = scalar_lea.vmem %s0, 9
    %s49 = smov 3
    %v50 = vld [vmem:[%s48] ss:$16 sm:%s49]
    %51 = vrot.lane.b32.xlu0 %v50, 72
    %v52 = vpop.permute.xlu0 %51
    %vm53 = vcmask 654912
    %54 = vst.msk [vmem:[#allocation0] ss:$8 sm:$0x3] %vm53, %v52
    %s55 = scalar_lea.vmem %s0, 8
    %s56 = smov 3
    %v57 = vld [vmem:[%s55] ss:$16 sm:%s56]
    %58 = vrot.lane.b32.xlu0 %v57, 64
    %v59 = vpop.permute.xlu0 %58
    %vm60 = vcmask 589312
    %61 = vst.msk [vmem:[#allocation0] ss:$8 sm:$0x3] %vm60, %v59
    %s62 = scalar_lea.vmem %s0, 7
    %s63 = smov 3
    %v64 = vld [vmem:[%s62] ss:$16 sm:%s63]
    %65 = vrot.lane.b32.xlu0 %v64, 56
    %v66 = vpop.permute.xlu0 %65
    %vm67 = vcmask 523712
    %68 = vst.msk [vmem:[#allocation0] ss:$8 sm:$0x3] %vm67, %v66
    %s69 = scalar_lea.vmem %s0, 6
    %s70 = smov 3
    %v71 = vld [vmem:[%s69] ss:$16 sm:%s70]
    %72 = vrot.lane.b32.xlu0 %v71, 48
    %v73 = vpop.permute.xlu0 %72
    %vm74 = vcmask 458112
    %75 = vst.msk [vmem:[#allocation0] ss:$8 sm:$0x3] %vm74, %v73
    %s76 = scalar_lea.vmem %s0, 5
    %s77 = smov 3
    %v78 = vld [vmem:[%s76] ss:$16 sm:%s77]
    %79 = vrot.lane.b32.xlu0 %v78, 40
    %v80 = vpop.permute.xlu0 %79
    %vm81 = vcmask 392512
    %82 = vst.msk [vmem:[#allocation0] ss:$8 sm:$0x3] %vm81, %v80
    %s83 = scalar_lea.vmem %s0, 4
    %s84 = smov 3
    %v85 = vld [vmem:[%s83] ss:$16 sm:%s84]
    %86 = vrot.lane.b32.xlu0 %v85, 32
    %v87 = vpop.permute.xlu0 %86
    %vm88 = vcmask 326912
    %89 = vst.msk [vmem:[#allocation0] ss:$8 sm:$0x3] %vm88, %v87
    %s90 = scalar_lea.vmem %s0, 3
    %s91 = smov 3
    %v92 = vld [vmem:[%s90] ss:$16 sm:%s91]
    %93 = vrot.lane.b32.xlu0 %v92, 24
    %v94 = vpop.permute.xlu0 %93
    %vm95 = vcmask 261312
    %96 = vst.msk [vmem:[#allocation0] ss:$8 sm:$0x3] %vm95, %v94
    %s97 = scalar_lea.vmem %s0, 2
    %s98 = smov 3
    %v99 = vld [vmem:[%s97] ss:$16 sm:%s98]
    %100 = vrot.lane.b32.xlu0 %v99, 16
    %v101 = vpop.permute.xlu0 %100
    %vm102 = vcmask 195712
    %103 = vst.msk [vmem:[#allocation0] ss:$8 sm:$0x3] %vm102, %v101
    %s104 = scalar_lea.vmem %s0, 1
    %s105 = smov 3
    %v106 = vld [vmem:[%s104] ss:$16 sm:%s105]
    %107 = vrot.lane.b32.xlu0 %v106, 8
    %v108 = vpop.permute.xlu0 %107
    %vm109 = vcmask 130112
    %110 = vst.msk [vmem:[#allocation0] ss:$8 sm:$0x3] %vm109, %v108
    %s112 = sshll.u32 1, 1
    %s113 = ssub.s32 %s112, 1
    %v115 = vld [vmem:[#allocation0] sm:%s113]
    %s116 = sshll.u32 1, 1
    %s117 = ssub.s32 %s116, 1
    %118 = vst [vmem:[%s1] sm:%s117] %v115
    %s119 = scalar_lea.vmem [#allocation0], 8
    %v120 = vld [vmem:[%s119] sm:%s113]
    %s121 = sshll.u32 1, 1
    %s122 = ssub.s32 %s121, 1
    %s123 = scalar_lea.vmem %s1, 1
    %124 = vst [vmem:[%s123] sm:%s122] %v120

// kernel: tile.28
$region0: #{tile.28}
  #allocation0 [shape = 's32[1]{0}', space=sflag, size = 0x4, scoped, tag = 'scoped memory for tile.28']
  %s0 = inlined_call_operand.vmem [shape: f32[8], index: 0, kind: input, shape index: {}]
  %s1 = inlined_call_operand.vmem [shape: f32[8,8], index: 1, kind: output, shape index: {}]
  // Predicated region
  $region2: #{tile.28} parent=0 // pred_check
    _
  $region3: #{tile.28} parent=0 // pred_check_branch
    %3 = sbr.rel (0) target = $region5
  $region4: #{tile.28} parent=0 // pred_region
    _
  $region5: #{tile.28} parent=0 // pred_fallthru
    _
  %v4 = vld [vmem:[%s0] ss:$0 sm:$0xff]
  %5 = vst [vmem:[%s1] sm:$0xff] %v4

// kernel: tile.29
$region0: #{tile.29}
  %s0 = inlined_call_operand.vmem [shape: f32[8,8], index: 0, kind: input, shape index: {}]
  %s1 = inlined_call_operand.vmem [shape: f32[1,64], index: 1, kind: output, shape index: {}]
  $region1: #{tile.29} parent=0
    #allocation0 [shape = 'u8[4096]{0}', space=vmem, size = 0x1000, scoped, tag = 'scoped mem for output reshape']
    %v2 = vld [vmem:[%s0] sm:$0x1]
    %vm3 = vcmask 64512
    %4 = vst.msk [vmem:[#allocation0] sm:$0x1] %vm3, %v2
    %s5 = scalar_lea.vmem %s0, 7
    %v6 = vld [vmem:[%s5] sm:$0x1]
    %7 = vrot.lane.b32.xlu0 %v6, 56
    %v8 = vpop.permute.xlu0 %7
    %vm9 = vcmask 523712
    %10 = vst.msk [vmem:[#allocation0] sm:$0x1] %vm9, %v8
    %s11 = scalar_lea.vmem %s0, 6
    %v12 = vld [vmem:[%s11] sm:$0x1]
    %13 = vrot.lane.b32.xlu0 %v12, 48
    %v14 = vpop.permute.xlu0 %13
    %vm15 = vcmask 458112
    %16 = vst.msk [vmem:[#allocation0] sm:$0x1] %vm15, %v14
    %s17 = scalar_lea.vmem %s0, 5
    %v18 = vld [vmem:[%s17] sm:$0x1]
    %19 = vrot.lane.b32.xlu0 %v18, 40
    %v20 = vpop.permute.xlu0 %19
    %vm21 = vcmask 392512
    %22 = vst.msk [vmem:[#allocation0] sm:$0x1] %vm21, %v20
    %s23 = scalar_lea.vmem %s0, 4
    %v24 = vld [vmem:[%s23] sm:$0x1]
    %25 = vrot.lane.b32.xlu0 %v24, 32
    %v26 = vpop.permute.xlu0 %25
    %vm27 = vcmask 326912
    %28 = vst.msk [vmem:[#allocation0] sm:$0x1] %vm27, %v26
    %s29 = scalar_lea.vmem %s0, 3
    %v30 = vld [vmem:[%s29] sm:$0x1]
    %31 = vrot.lane.b32.xlu0 %v30, 24
    %v32 = vpop.permute.xlu0 %31
    %vm33 = vcmask 261312
    %34 = vst.msk [vmem:[#allocation0] sm:$0x1] %vm33, %v32
    %s35 = scalar_lea.vmem %s0, 2
    %v36 = vld [vmem:[%s35] sm:$0x1]
    %37 = vrot.lane.b32.xlu0 %v36, 16
    %v38 = vpop.permute.xlu0 %37
    %vm39 = vcmask 195712
    %40 = vst.msk [vmem:[#allocation0] sm:$0x1] %vm39, %v38
    %s41 = scalar_lea.vmem %s0, 1
    %v42 = vld [vmem:[%s41] sm:$0x1]
    %43 = vrot.lane.b32.xlu0 %v42, 8
    %v44 = vpop.permute.xlu0 %43
    %vm45 = vcmask 130112
    %46 = vst.msk [vmem:[#allocation0] sm:$0x1] %vm45, %v44
    %s48 = sshll.u32 1, 1
    %s49 = ssub.s32 %s48, 1
    %v51 = vld [vmem:[#allocation0] sm:%s49]
    %s52 = sshll.u32 1, 1
    %s53 = ssub.s32 %s52, 1
    %54 = vst [vmem:[%s1] sm:%s53] %v51

// kernel: block_forward.3
$region0: #{block_forward.3}
  #allocation0 [shape = 'u32[]', space=smem, size = 0x4, offset = 0x4, fixed_abs, tag = 'smem constant byte address 0x4 - core index']
  #allocation1 [shape = 'u32[144,128]{1,0:T(1,128)}', space=vmem, size = 0x12000, scoped, tag = 'internal scratch']
  %s0 = inlined_call_operand.vmem [shape: bf16[2,8,256], index: 0, kind: input, shape index: {}]
  %s1 = inlined_call_operand.vmem [shape: f32[1,256], index: 1, kind: input, shape index: {}]
  %s2 = inlined_call_operand.vmem [shape: f32[1,256], index: 2, kind: input, shape index: {}]
  %s3 = inlined_call_operand.vmem [shape: bf16[256,64], index: 3, kind: input, shape index: {}]
  %s4 = inlined_call_operand.vmem [shape: bf16[128,64], index: 4, kind: input, shape index: {}]
  %s5 = inlined_call_operand.vmem [shape: bf16[128,64], index: 5, kind: input, shape index: {}]
  %s6 = inlined_call_operand.vmem [shape: f32[1,64], index: 6, kind: input, shape index: {}]
  %s7 = inlined_call_operand.vmem [shape: f32[2,8,64], index: 7, kind: output, shape index: {}]
  %s8 = sld [smem:[#allocation0]]
  $region61: #{block_forward.3} parent=0
    _
  %s10 = ssub.s32 1, %s8
  %s11 = scalar_select 0, %s10, %s8
  loop: start=0, step=1, limit=4
  $region2: #{block_forward.3} parent=0 // loop_pre_header
    _
  $region3: #{block_forward.3} parent=0 // loop_header
    %s13 = sphi 0, %s17
    %p14 = scmp.ge.s32.totalorder %s13, 4
    %s23 = sphi 0, %s25
    %s26 = sphi 0, %s23
    %s27 = sphi 0, %s26
    %s43 = sphi 0, %s27
    %s47 = sphi 0, %s47
    %s49 = sphi 0, %s47
    %s50 = sphi 0, %s49
    %s64 = sphi 0, %s50
    %s68 = sphi 0, %s68
    %s70 = sphi 0, %s68
    %s71 = sphi 0, %s70
    %s85 = sphi 0, %s71
    %s89 = sphi 0, %s89
    %s91 = sphi 0, %s89
    %s92 = sphi 0, %s91
    %s106 = sphi 0, %s92
    %s110 = sphi 0, %s110
    %s112 = sphi 0, %s110
    %s113 = sphi 0, %s112
    %s127 = sphi 0, %s113
    %s131 = sphi 0, %s131
    %s133 = sphi 0, %s131
    %s134 = sphi 0, %s133
    %s148 = sphi 0, %s134
    %s152 = sphi 0, %s152
    %s154 = sphi 0, %s152
    %s155 = sphi 0, %s154
    %s169 = sphi 0, %s155
    %s175 = sphi 0, %s177
    %s178 = sphi 0, %s175
    %s179 = sphi 0, %s178
    %s195 = sphi 0, %s179
  $region4: #{block_forward.3} parent=0 // loop_header_branch
    %16 = sbr.rel (%p14) target = $region8
  $region5: #{block_forward.3} parent=0 // loop_body
    %s18 = ssub.s32 %s13, 1
    %s19 = ssub.s32 %s13, 2
    %s20 = sadd.s32 %s13, 1
    %s21 = ssub.s32 %s13, %s20
    %p22 = scmp.eq.s32.totalorder %s21, 0
    %s24 = sadd.s32 %s23, 1
    %s25 = scalar_select %p22, %s23, %s24
    %p28 = pneg %p22
    %p29 = scmp.eq.s32.totalorder %s13, 1
    %p30 = por %p28, %p29
    %p31 = scmp.ne.s32.totalorder %s23, %s26
    %p32 = scmp.eq.s32.totalorder %s13, 0
    %p33 = por %p31, %p32
    %p34 = scmp.ne.s32.totalorder %s23, %s26
    %p35 = scmp.eq.s32.totalorder %s18, 1
    %p36 = por %p34, %p35
    %p37 = scmp.ne.s32.totalorder %s26, %s27
    %p38 = scmp.eq.s32.totalorder %s18, 0
    %p39 = por %p37, %p38
    %p40 = scmp.ne.s32.totalorder %s26, %s27
    %p41 = scmp.eq.s32.totalorder %s19, 1
    %p42 = por %p40, %p41
    %p44 = scmp.ne.s32.totalorder %s27, %s43
    %p45 = scmp.eq.s32.totalorder %s19, 0
    %p46 = por %p44, %p45
    %s48 = sadd.s32 %s47, 1
    %p51 = scmp.eq.s32.totalorder %s13, 1
    %p52 = scmp.ne.s32.totalorder %s47, %s49
    %p53 = scmp.eq.s32.totalorder %s13, 0
    %p54 = por %p52, %p53
    %p55 = scmp.ne.s32.totalorder %s47, %s49
    %p56 = scmp.eq.s32.totalorder %s18, 1
    %p57 = por %p55, %p56
    %p58 = scmp.ne.s32.totalorder %s49, %s50
    %p59 = scmp.eq.s32.totalorder %s18, 0
    %p60 = por %p58, %p59
    %p61 = scmp.ne.s32.totalorder %s49, %s50
    %p62 = scmp.eq.s32.totalorder %s19, 1
    %p63 = por %p61, %p62
    %p65 = scmp.ne.s32.totalorder %s50, %s64
    %p66 = scmp.eq.s32.totalorder %s19, 0
    %p67 = por %p65, %p66
    %s69 = sadd.s32 %s68, 1
    %p72 = scmp.eq.s32.totalorder %s13, 1
    %p73 = scmp.ne.s32.totalorder %s68, %s70
    %p74 = scmp.eq.s32.totalorder %s13, 0
    %p75 = por %p73, %p74
    %p76 = scmp.ne.s32.totalorder %s68, %s70
    %p77 = scmp.eq.s32.totalorder %s18, 1
    %p78 = por %p76, %p77
    %p79 = scmp.ne.s32.totalorder %s70, %s71
    %p80 = scmp.eq.s32.totalorder %s18, 0
    %p81 = por %p79, %p80
    %p82 = scmp.ne.s32.totalorder %s70, %s71
    %p83 = scmp.eq.s32.totalorder %s19, 1
    %p84 = por %p82, %p83
    %p86 = scmp.ne.s32.totalorder %s71, %s85
    %p87 = scmp.eq.s32.totalorder %s19, 0
    %p88 = por %p86, %p87
    %s90 = sadd.s32 %s89, 1
    %p93 = scmp.eq.s32.totalorder %s13, 1
    %p94 = scmp.ne.s32.totalorder %s89, %s91
    %p95 = scmp.eq.s32.totalorder %s13, 0
    %p96 = por %p94, %p95
    %p97 = scmp.ne.s32.totalorder %s89, %s91
    %p98 = scmp.eq.s32.totalorder %s18, 1
    %p99 = por %p97, %p98
    %p100 = scmp.ne.s32.totalorder %s91, %s92
    %p101 = scmp.eq.s32.totalorder %s18, 0
    %p102 = por %p100, %p101
    %p103 = scmp.ne.s32.totalorder %s91, %s92
    %p104 = scmp.eq.s32.totalorder %s19, 1
    %p105 = por %p103, %p104
    %p107 = scmp.ne.s32.totalorder %s92, %s106
    %p108 = scmp.eq.s32.totalorder %s19, 0
    %p109 = por %p107, %p108
    %s111 = sadd.s32 %s110, 1
    %p114 = scmp.eq.s32.totalorder %s13, 1
    %p115 = scmp.ne.s32.totalorder %s110, %s112
    %p116 = scmp.eq.s32.totalorder %s13, 0
    %p117 = por %p115, %p116
    %p118 = scmp.ne.s32.totalorder %s110, %s112
    %p119 = scmp.eq.s32.totalorder %s18, 1
    %p120 = por %p118, %p119
    %p121 = scmp.ne.s32.totalorder %s112, %s113
    %p122 = scmp.eq.s32.totalorder %s18, 0
    %p123 = por %p121, %p122
    %p124 = scmp.ne.s32.totalorder %s112, %s113
    %p125 = scmp.eq.s32.totalorder %s19, 1
    %p126 = por %p124, %p125
    %p128 = scmp.ne.s32.totalorder %s113, %s127
    %p129 = scmp.eq.s32.totalorder %s19, 0
    %p130 = por %p128, %p129
    %s132 = sadd.s32 %s131, 1
    %p135 = scmp.eq.s32.totalorder %s13, 1
    %p136 = scmp.ne.s32.totalorder %s131, %s133
    %p137 = scmp.eq.s32.totalorder %s13, 0
    %p138 = por %p136, %p137
    %p139 = scmp.ne.s32.totalorder %s131, %s133
    %p140 = scmp.eq.s32.totalorder %s18, 1
    %p141 = por %p139, %p140
    %p142 = scmp.ne.s32.totalorder %s133, %s134
    %p143 = scmp.eq.s32.totalorder %s18, 0
    %p144 = por %p142, %p143
    %p145 = scmp.ne.s32.totalorder %s133, %s134
    %p146 = scmp.eq.s32.totalorder %s19, 1
    %p147 = por %p145, %p146
    %p149 = scmp.ne.s32.totalorder %s134, %s148
    %p150 = scmp.eq.s32.totalorder %s19, 0
    %p151 = por %p149, %p150
    %s153 = sadd.s32 %s152, 1
    %p156 = scmp.eq.s32.totalorder %s13, 1
    %p157 = scmp.ne.s32.totalorder %s152, %s154
    %p158 = scmp.eq.s32.totalorder %s13, 0
    %p159 = por %p157, %p158
    %p160 = scmp.ne.s32.totalorder %s152, %s154
    %p161 = scmp.eq.s32.totalorder %s18, 1
    %p162 = por %p160, %p161
    %p163 = scmp.ne.s32.totalorder %s154, %s155
    %p164 = scmp.eq.s32.totalorder %s18, 0
    %p165 = por %p163, %p164
    %p166 = scmp.ne.s32.totalorder %s154, %s155
    %p167 = scmp.eq.s32.totalorder %s19, 1
    %p168 = por %p166, %p167
    %p170 = scmp.ne.s32.totalorder %s155, %s169
    %p171 = scmp.eq.s32.totalorder %s19, 0
    %p172 = por %p170, %p171
    %s173 = ssub.s32 %s13, %s20
    %p174 = scmp.eq.s32.totalorder %s173, 0
    %s176 = sadd.s32 %s175, 1
    %s177 = scalar_select %p174, %s175, %s176
    %p180 = pneg %p174
    %p181 = scmp.eq.s32.totalorder %s13, 1
    %p182 = por %p180, %p181
    %p183 = scmp.ne.s32.totalorder %s175, %s178
    %p184 = scmp.eq.s32.totalorder %s13, 0
    %p185 = por %p183, %p184
    %p186 = scmp.ne.s32.totalorder %s175, %s178
    %p187 = scmp.eq.s32.totalorder %s18, 1
    %p188 = por %p186, %p187
    %p189 = scmp.ne.s32.totalorder %s178, %s179
    %p190 = scmp.eq.s32.totalorder %s18, 0
    %p191 = por %p189, %p190
    %p192 = scmp.ne.s32.totalorder %s178, %s179
    %p193 = scmp.eq.s32.totalorder %s19, 1
    %p194 = por %p192, %p193
    %p196 = scmp.ne.s32.totalorder %s179, %s195
    %p197 = scmp.eq.s32.totalorder %s19, 0
    %p198 = por %p196, %p197
    %p199 = scmp.le.s32.totalorder 1, %s13
    %p200 = scmp.lt.s32.totalorder %s13, 3
    %p201 = pnand %p199, %p200
    %p202 = pneg %p201
    // Predicated region
    $region9: #{block_forward.3} parent=5 // pred_check
      _
    $region10: #{block_forward.3} parent=5 // pred_check_branch
      %204 = sbr.rel (%p201) target = $region12
    $region11: #{block_forward.3} parent=5 // pred_region
      %s205 = ssub.s32 %s13, 1
      // Predicated region
      $region13: #{block_forward.3} parent=11 // pred_check
        %p206 = pneg %p60
      $region14: #{block_forward.3} parent=11 // pred_check_branch
        %208 = sbr.rel (%p206) target = $region16
      $region15: #{block_forward.3} parent=11 // pred_region
        _
      $region16: #{block_forward.3} parent=11 // pred_fallthru
        _
      // Predicated region
      $region17: #{block_forward.3} parent=11 // pred_check
        %p209 = pneg %p81
      $region18: #{block_forward.3} parent=11 // pred_check_branch
        %211 = sbr.rel (%p209) target = $region20
      $region19: #{block_forward.3} parent=11 // pred_region
        _
      $region20: #{block_forward.3} parent=11 // pred_fallthru
        _
      // Predicated region
      $region21: #{block_forward.3} parent=11 // pred_check
        %p212 = pneg %p102
      $region22: #{block_forward.3} parent=11 // pred_check_branch
        %214 = sbr.rel (%p212) target = $region24
      $region23: #{block_forward.3} parent=11 // pred_region
        _
      $region24: #{block_forward.3} parent=11 // pred_fallthru
        _
      // Predicated region
      $region25: #{block_forward.3} parent=11 // pred_check
        %p215 = pneg %p123
      $region26: #{block_forward.3} parent=11 // pred_check_branch
        %217 = sbr.rel (%p215) target = $region28
      $region27: #{block_forward.3} parent=11 // pred_region
        _
      $region28: #{block_forward.3} parent=11 // pred_fallthru
        _
      // Predicated region
      $region29: #{block_forward.3} parent=11 // pred_check
        %p218 = pneg %p144
      $region30: #{block_forward.3} parent=11 // pred_check_branch
        %220 = sbr.rel (%p218) target = $region32
      $region31: #{block_forward.3} parent=11 // pred_region
        _
      $region32: #{block_forward.3} parent=11 // pred_fallthru
        _
      // Predicated region
      $region33: #{block_forward.3} parent=11 // pred_check
        %p221 = pneg %p165
      $region34: #{block_forward.3} parent=11 // pred_check_branch
        %223 = sbr.rel (%p221) target = $region36
      $region35: #{block_forward.3} parent=11 // pred_region
        _
      $region36: #{block_forward.3} parent=11 // pred_fallthru
        _
    $region12: #{block_forward.3} parent=5 // pred_fallthru
      _
    %p224 = scmp.lt.s32.totalorder %s13, 2
    // Predicated region
    $region37: #{block_forward.3} parent=5 // pred_check
      %p225 = pneg %p224
    $region38: #{block_forward.3} parent=5 // pred_check_branch
      %227 = sbr.rel (%p225) target = $region40
    $region39: #{block_forward.3} parent=5 // pred_region
      // Predicated region
      $region41: #{block_forward.3} parent=39 // pred_check
        %p228 = pneg %p33
      $region42: #{block_forward.3} parent=39 // pred_check_branch
        %230 = sbr.rel (%p228) target = $region44
      $region43: #{block_forward.3} parent=39 // pred_region
        %p231 = scmp.lt.s32.totalorder %s13, 1
        %s232 = scalar_select %p231, %s13, 1
        %s233 = smul.addr %s232, 2
        %s234 = smul.addr %s233, 4
        %s235 = scalar_lea.vmem %s0, %s234
      $region44: #{block_forward.3} parent=39 // pred_fallthru
        _
    $region40: #{block_forward.3} parent=5 // pred_fallthru
      _
    %p236 = scmp.le.s32.totalorder 1, %s13
    %p237 = scmp.lt.s32.totalorder %s13, 3
    %p238 = pnand %p236, %p237
    %p239 = pneg %p238
    // Predicated region
    $region45: #{block_forward.3} parent=5 // pred_check
      _
    $region46: #{block_forward.3} parent=5 // pred_check_branch
      %241 = sbr.rel (%p238) target = $region48
    $region47: #{block_forward.3} parent=5 // pred_region
      %s242 = ssub.s32 %s13, 1
      %p243 = scmp.lt.s32.totalorder %s18, 1
      %s244 = scalar_select %p243, %s18, 1
      %s245 = smul.addr %s244, 2
      %s246 = smul.addr %s245, 4
      %s247 = scalar_lea.vmem %s0, %s246
      %p248 = pneg %p39
      %p249 = pneg %p36
      %p250 = pneg %p60
      %p251 = pneg %p57
      %p252 = pneg %p81
      %p253 = pneg %p78
      %p254 = pneg %p102
      %p255 = pneg %p99
      %p256 = pneg %p123
      %p257 = pneg %p120
      %p258 = pneg %p144
      %p259 = pneg %p141
      %p260 = pneg %p165
      %p261 = pneg %p162
      %p262 = pneg %p191
      %p263 = pneg %p188
      %p264 = scmp.lt.s32.totalorder %s18, 1
      %s265 = scalar_select %p264, %s18, 1
      %s266 = smul.addr %s265, 8
      %s267 = scalar_lea.vmem %s7, %s266
      %p268 = scmp.lt.s32.totalorder %s18, 1
      %s269 = scalar_select %p268, %s18, 1
      %s270 = smul.addr %s269, 2
      %s271 = smul.addr %s270, 4
      %s272 = scalar_lea.vmem %s0, %s271
      %p273 = scmp.lt.s32.totalorder %s18, 1
      %s274 = scalar_select %p273, %s18, 1
      %s275 = smul.addr %s274, 8
      %s276 = scalar_lea.vmem %s7, %s275
      %v278 = vld [vmem:[%s272] sm:$0xff]
      %v279 = vunpack.c.l.bf16 %v278
      %v280 = vunpack.c.h.bf16 %v278
      %v281 = vld [vmem:[%s1] sm:$0x3]
      %v283 = vlaneseq
      %v284 = vshrl.u32 %v283, 7
      %v285 = vsub.s32 0, %v284
      %v286 = vrot.slane %v281, %v285
      %v287 = vlaneseq
      %v288 = vshrl.u32 %v287, 7
      %v289 = vsub.s32 1, %v288
      %v290 = vrot.slane %v281, %v289
      %v293 = vmul.f32 %v279, %v286
      %v294 = vmul.f32 %v280, %v290
      %v295 = vld [vmem:[%s2] sm:$0x3]
      %v297 = vlaneseq
      %v298 = vshrl.u32 %v297, 7
      %v299 = vsub.s32 0, %v298
      %v300 = vrot.slane %v295, %v299
      %v301 = vlaneseq
      %v302 = vshrl.u32 %v301, 7
      %v303 = vsub.s32 1, %v302
      %v304 = vrot.slane %v295, %v303
      %v307 = vadd.f32 %v293, %v300
      %v308 = vadd.f32 %v294, %v304
      %v309 = vpack.c.bf16 %v307, %v307
      %v310 = vpack.c.bf16 %v308, %v308
      %v312 = vshrl.u32 %v309, 16
      %v314 = vrot.slane %v312, 7
      %v315 = vshll.u32 %v309, 16
      %v317 = vor.u32 %v314, %v315
      %v319 = vshrl.u32 %v310, 16
      %v321 = vrot.slane %v319, 7
      %v322 = vshll.u32 %v310, 16
      %v324 = vor.u32 %v321, %v322
      %vm327 = vcmask 1040384
      %vm328 = vsmask.f32 256
      %vm329 = vmand %vm327, %vm328
      %v330 = vsel %vm329, 0, %v317
      %v331 = vsel %vm329, 0, %v324
      %vm332 = vcmask 1044480
      %vm333 = vsmask.f32 4352
      %vm334 = vmand %vm332, %vm333
      %v335 = vsel %vm334, %v330, 0
      %v336 = vsel %vm334, %v331, 0
      %v337 = vld [vmem:[%s3] sm:$0xf]
      %v338 = vld [vmem:[%s3 + $0x4] sm:$0xf]
      %v339 = vld [vmem:[%s3 + $0x8] sm:$0xf]
      %v340 = vld [vmem:[%s3 + $0xc] sm:$0xf]
      %v341 = vld [vmem:[%s3 + $0x10] sm:$0xf]
      %v342 = vld [vmem:[%s3 + $0x14] sm:$0xf]
      %v343 = vld [vmem:[%s3 + $0x18] sm:$0xf]
      %v344 = vld [vmem:[%s3 + $0x1c] sm:$0xf]
      %v345 = vld [vmem:[%s3 + $0x20] sm:$0xf]
      %v346 = vld [vmem:[%s3 + $0x24] sm:$0xf]
      %v347 = vld [vmem:[%s3 + $0x28] sm:$0xf]
      %v348 = vld [vmem:[%s3 + $0x2c] sm:$0xf]
      %v349 = vld [vmem:[%s3 + $0x30] sm:$0xf]
      %v350 = vld [vmem:[%s3 + $0x34] sm:$0xf]
      %v351 = vld [vmem:[%s3 + $0x38] sm:$0xf]
      %v352 = vld [vmem:[%s3 + $0x3c] sm:$0xf]
      %v353 = vld [vmem:[%s3 + $0x40] sm:$0xf]
      %v354 = vld [vmem:[%s3 + $0x44] sm:$0xf]
      %v355 = vld [vmem:[%s3 + $0x48] sm:$0xf]
      %v356 = vld [vmem:[%s3 + $0x4c] sm:$0xf]
      %v357 = vld [vmem:[%s3 + $0x50] sm:$0xf]
      %v358 = vld [vmem:[%s3 + $0x54] sm:$0xf]
      %v359 = vld [vmem:[%s3 + $0x58] sm:$0xf]
      %v360 = vld [vmem:[%s3 + $0x5c] sm:$0xf]
      %v361 = vld [vmem:[%s3 + $0x60] sm:$0xf]
      %v362 = vld [vmem:[%s3 + $0x64] sm:$0xf]
      %v363 = vld [vmem:[%s3 + $0x68] sm:$0xf]
      %v364 = vld [vmem:[%s3 + $0x6c] sm:$0xf]
      %v365 = vld [vmem:[%s3 + $0x70] sm:$0xf]
      %v366 = vld [vmem:[%s3 + $0x74] sm:$0xf]
      %v367 = vld [vmem:[%s3 + $0x78] sm:$0xf]
      %v368 = vld [vmem:[%s3 + $0x7c] sm:$0xf]
      %v369 = vld [vmem:[%s4] sm:$0xf]
      %v370 = vld [vmem:[%s4 + $0x4] sm:$0xf]
      %v371 = vld [vmem:[%s4 + $0x8] sm:$0xf]
      %v372 = vld [vmem:[%s4 + $0xc] sm:$0xf]
      %v373 = vld [vmem:[%s4 + $0x10] sm:$0xf]
      %v374 = vld [vmem:[%s4 + $0x14] sm:$0xf]
      %v375 = vld [vmem:[%s4 + $0x18] sm:$0xf]
      %v376 = vld [vmem:[%s4 + $0x1c] sm:$0xf]
      %v377 = vld [vmem:[%s4 + $0x20] sm:$0xf]
      %v378 = vld [vmem:[%s4 + $0x24] sm:$0xf]
      %v379 = vld [vmem:[%s4 + $0x28] sm:$0xf]
      %v380 = vld [vmem:[%s4 + $0x2c] sm:$0xf]
      %v381 = vld [vmem:[%s4 + $0x30] sm:$0xf]
      %v382 = vld [vmem:[%s4 + $0x34] sm:$0xf]
      %v383 = vld [vmem:[%s4 + $0x38] sm:$0xf]
      %v384 = vld [vmem:[%s4 + $0x3c] sm:$0xf]
      %v401 = vunpack.c.l.b16 %v369
      %v402 = vunpack.c.l.b16 %v370
      %v403 = vunpack.c.l.b16 %v371
      %v404 = vunpack.c.l.b16 %v372
      %v405 = vunpack.c.l.b16 %v373
      %v406 = vunpack.c.l.b16 %v374
      %v407 = vunpack.c.l.b16 %v375
      %v408 = vunpack.c.l.b16 %v376
      %v409 = vunpack.c.l.b16 %v377
      %v410 = vunpack.c.l.b16 %v378
      %v411 = vunpack.c.l.b16 %v379
      %v412 = vunpack.c.l.b16 %v380
      %v413 = vunpack.c.l.b16 %v381
      %v414 = vunpack.c.l.b16 %v382
      %v415 = vunpack.c.l.b16 %v383
      %v416 = vunpack.c.l.b16 %v384
      %v417 = vpack.c.b16 %v402, %v401
      %v418 = vpack.c.b16 %v404, %v403
      %v419 = vpack.c.b16 %v406, %v405
      %v420 = vpack.c.b16 %v408, %v407
      %v421 = vpack.c.b16 %v410, %v409
      %v422 = vpack.c.b16 %v412, %v411
      %v423 = vpack.c.b16 %v414, %v413
      %v424 = vpack.c.b16 %v416, %v415
      %433 = vmatprep.subr.bf16.mxu0 0
      %434 = vmatpush1.bf16.msra.mxu0 %v424
      %435 = vmatprep.subr.bf16.mxu0 0
      %436 = vmatpush1.bf16.msra.mxu0 %v423
      %437 = vmatprep.subr.bf16.mxu0 0
      %438 = vmatpush1.bf16.msra.mxu0 %v422
      %439 = vmatprep.subr.bf16.mxu0 0
      %440 = vmatpush1.bf16.msra.mxu0 %v421
      %441 = vmatprep.subr.bf16.mxu0 0
      %442 = vmatpush1.bf16.msra.mxu0 %v420
      %443 = vmatprep.subr.bf16.mxu0 0
      %444 = vmatpush1.bf16.msra.mxu0 %v419
      %445 = vmatprep.subr.bf16.mxu0 0
      %446 = vmatpush1.bf16.msra.mxu0 %v418
      %447 = vmatprep.subr.bf16.mxu0 0
      %448 = vmatpush1.bf16.msra.mxu0 %v417
      %449 = vmatprep.subr.bf16.mxu0 0
      %450 = vmatpush2.bf16.msra.mxu0 0
      %451 = vmatprep.subr.bf16.mxu0 0
      %452 = vmatpush2.bf16.msra.mxu0 0
      %453 = vmatprep.subr.bf16.mxu0 0
      %454 = vmatpush2.bf16.msra.mxu0 0
      %455 = vmatprep.subr.bf16.mxu0 0
      %456 = vmatpush2.bf16.msra.mxu0 0
      %457 = vmatprep.subr.bf16.mxu0 0
      %458 = vmatpush2.bf16.msra.mxu0 0
      %459 = vmatprep.subr.bf16.mxu0 0
      %460 = vmatpush2.bf16.msra.mxu0 0
      %461 = vmatprep.subr.bf16.mxu0 0
      %462 = vmatpush2.bf16.msra.mxu0 0
      %463 = vmatprep.subr.bf16.mxu0 0
      %464 = vmatpush2.bf16.msra.mxu0 0
      %465 = vmatprep.mubr.bf16.mxu0 0
      %466 = vmatmul.mubr.bf16.gmra.mxu0 %v336
      %v467 = vpop.f32.mrf.mxu0
      %v468 = vadd.f32 0.0, %v467
      %v469 = vpop.f32.mrf.mxu0
      %v470 = vpop.f32.mrf.mxu0
      %v471 = vpop.f32.mrf.mxu0
      %472 = vdwg.mxu0
      %v474 = vshrl.u32 %v335, 16
      %v476 = vshll.u32 %v335, 16
      %v478 = vrot.slane %v476, 1
      %v479 = vor.u32 %v474, %v478
      %v481 = vshrl.u32 %v336, 16
      %v483 = vshll.u32 %v336, 16
      %v485 = vrot.slane %v483, 1
      %v486 = vor.u32 %v481, %v485
      %v521 = vunpack.c.l.b16 %v337
      %v522 = vunpack.c.l.b16 %v338
      %v523 = vunpack.c.l.b16 %v339
      %v524 = vunpack.c.l.b16 %v340
      %v525 = vunpack.c.l.b16 %v341
      %v526 = vunpack.c.l.b16 %v342
      %v527 = vunpack.c.l.b16 %v343
      %v528 = vunpack.c.l.b16 %v344
      %v529 = vunpack.c.l.b16 %v345
      %v530 = vunpack.c.l.b16 %v346
      %v531 = vunpack.c.l.b16 %v347
      %v532 = vunpack.c.l.b16 %v348
      %v533 = vunpack.c.l.b16 %v349
      %v534 = vunpack.c.l.b16 %v350
      %v535 = vunpack.c.l.b16 %v351
      %v536 = vunpack.c.l.b16 %v352
      %v537 = vunpack.c.l.b16 %v353
      %v538 = vunpack.c.l.b16 %v354
      %v539 = vunpack.c.l.b16 %v355
      %v540 = vunpack.c.l.b16 %v356
      %v541 = vunpack.c.l.b16 %v357
      %v542 = vunpack.c.l.b16 %v358
      %v543 = vunpack.c.l.b16 %v359
      %v544 = vunpack.c.l.b16 %v360
      %v545 = vunpack.c.l.b16 %v361
      %v546 = vunpack.c.l.b16 %v362
      %v547 = vunpack.c.l.b16 %v363
      %v548 = vunpack.c.l.b16 %v364
      %v549 = vunpack.c.l.b16 %v365
      %v550 = vunpack.c.l.b16 %v366
      %v551 = vunpack.c.l.b16 %v367
      %v552 = vunpack.c.l.b16 %v368
      %v553 = vpack.c.b16 %v522, %v521
      %v554 = vpack.c.b16 %v524, %v523
      %v555 = vpack.c.b16 %v526, %v525
      %v556 = vpack.c.b16 %v528, %v527
      %v557 = vpack.c.b16 %v530, %v529
      %v558 = vpack.c.b16 %v532, %v531
      %v559 = vpack.c.b16 %v534, %v533
      %v560 = vpack.c.b16 %v536, %v535
      %v561 = vpack.c.b16 %v538, %v537
      %v562 = vpack.c.b16 %v540, %v539
      %v563 = vpack.c.b16 %v542, %v541
      %v564 = vpack.c.b16 %v544, %v543
      %v565 = vpack.c.b16 %v546, %v545
      %v566 = vpack.c.b16 %v548, %v547
      %v567 = vpack.c.b16 %v550, %v549
      %v568 = vpack.c.b16 %v552, %v551
      %585 = vmatprep.subr.bf16.mxu0 0
      %586 = vmatpush1.bf16.msra.mxu0 %v560
      %587 = vmatprep.subr.bf16.mxu0 0
      %588 = vmatpush1.bf16.msra.mxu0 %v559
      %589 = vmatprep.subr.bf16.mxu0 0
      %590 = vmatpush1.bf16.msra.mxu0 %v558
      %591 = vmatprep.subr.bf16.mxu0 0
      %592 = vmatpush1.bf16.msra.mxu0 %v557
      %593 = vmatprep.subr.bf16.mxu0 0
      %594 = vmatpush1.bf16.msra.mxu0 %v556
      %595 = vmatprep.subr.bf16.mxu0 0
      %596 = vmatpush1.bf16.msra.mxu0 %v555
      %597 = vmatprep.subr.bf16.mxu0 0
      %598 = vmatpush1.bf16.msra.mxu0 %v554
      %599 = vmatprep.subr.bf16.mxu0 0
      %600 = vmatpush1.bf16.msra.mxu0 %v553
      %601 = vmatprep.subr.bf16.mxu0 0
      %602 = vmatpush2.bf16.msra.mxu0 %v568
      %603 = vmatprep.subr.bf16.mxu0 0
      %604 = vmatpush2.bf16.msra.mxu0 %v567
      %605 = vmatprep.subr.bf16.mxu0 0
      %606 = vmatpush2.bf16.msra.mxu0 %v566
      %607 = vmatprep.subr.bf16.mxu0 0
      %608 = vmatpush2.bf16.msra.mxu0 %v565
      %609 = vmatprep.subr.bf16.mxu0 0
      %610 = vmatpush2.bf16.msra.mxu0 %v564
      %611 = vmatprep.subr.bf16.mxu0 0
      %612 = vmatpush2.bf16.msra.mxu0 %v563
      %613 = vmatprep.subr.bf16.mxu0 0
      %614 = vmatpush2.bf16.msra.mxu0 %v562
      %615 = vmatprep.subr.bf16.mxu0 0
      %616 = vmatpush2.bf16.msra.mxu0 %v561
      %617 = vmatprep.mubr.bf16.mxu0 %v486
      %618 = vmatmul.mubr.bf16.gmra.mxu0 %v479
      %v619 = vpop.f32.mrf.mxu0
      %v620 = vadd.f32 %v468, %v619
      %v621 = vpop.f32.mrf.mxu0
      %v622 = vpop.f32.mrf.mxu0
      %v623 = vpop.f32.mrf.mxu0
      %624 = vdwg.mxu0
      %v625 = vld [vmem:[%s5] sm:$0xf]
      %v626 = vld [vmem:[%s5 + $0x4] sm:$0xf]
      %v627 = vld [vmem:[%s5 + $0x8] sm:$0xf]
      %v628 = vld [vmem:[%s5 + $0xc] sm:$0xf]
      %v629 = vld [vmem:[%s5 + $0x10] sm:$0xf]
      %v630 = vld [vmem:[%s5 + $0x14] sm:$0xf]
      %v631 = vld [vmem:[%s5 + $0x18] sm:$0xf]
      %v632 = vld [vmem:[%s5 + $0x1c] sm:$0xf]
      %v633 = vld [vmem:[%s5 + $0x20] sm:$0xf]
      %v634 = vld [vmem:[%s5 + $0x24] sm:$0xf]
      %v635 = vld [vmem:[%s5 + $0x28] sm:$0xf]
      %v636 = vld [vmem:[%s5 + $0x2c] sm:$0xf]
      %v637 = vld [vmem:[%s5 + $0x30] sm:$0xf]
      %v638 = vld [vmem:[%s5 + $0x34] sm:$0xf]
      %v639 = vld [vmem:[%s5 + $0x38] sm:$0xf]
      %v640 = vld [vmem:[%s5 + $0x3c] sm:$0xf]
      %v642 = vrot.slane %v335, 1
      %v660 = vunpack.c.l.b16 %v625
      %v661 = vunpack.c.l.b16 %v626
      %v662 = vunpack.c.l.b16 %v627
      %v663 = vunpack.c.l.b16 %v628
      %v664 = vunpack.c.l.b16 %v629
      %v665 = vunpack.c.l.b16 %v630
      %v666 = vunpack.c.l.b16 %v631
      %v667 = vunpack.c.l.b16 %v632
      %v668 = vunpack.c.l.b16 %v633
      %v669 = vunpack.c.l.b16 %v634
      %v670 = vunpack.c.l.b16 %v635
      %v671 = vunpack.c.l.b16 %v636
      %v672 = vunpack.c.l.b16 %v637
      %v673 = vunpack.c.l.b16 %v638
      %v674 = vunpack.c.l.b16 %v639
      %v675 = vunpack.c.l.b16 %v640
      %v676 = vpack.c.b16 %v661, %v660
      %v677 = vpack.c.b16 %v663, %v662
      %v678 = vpack.c.b16 %v665, %v664
      %v679 = vpack.c.b16 %v667, %v666
      %v680 = vpack.c.b16 %v669, %v668
      %v681 = vpack.c.b16 %v671, %v670
      %v682 = vpack.c.b16 %v673, %v672
      %v683 = vpack.c.b16 %v675, %v674
      %692 = vmatprep.subr.bf16.mxu0 0
      %693 = vmatpush1.bf16.msra.mxu0 %v683
      %694 = vmatprep.subr.bf16.mxu0 0
      %695 = vmatpush1.bf16.msra.mxu0 %v682
      %696 = vmatprep.subr.bf16.mxu0 0
      %697 = vmatpush1.bf16.msra.mxu0 %v681
      %698 = vmatprep.subr.bf16.mxu0 0
      %699 = vmatpush1.bf16.msra.mxu0 %v680
      %700 = vmatprep.subr.bf16.mxu0 0
      %701 = vmatpush1.bf16.msra.mxu0 %v679
      %702 = vmatprep.subr.bf16.mxu0 0
      %703 = vmatpush1.bf16.msra.mxu0 %v678
      %704 = vmatprep.subr.bf16.mxu0 0
      %705 = vmatpush1.bf16.msra.mxu0 %v677
      %706 = vmatprep.subr.bf16.mxu0 0
      %707 = vmatpush1.bf16.msra.mxu0 %v676
      %708 = vmatprep.subr.bf16.mxu0 0
      %709 = vmatpush2.bf16.msra.mxu0 0
      %710 = vmatprep.subr.bf16.mxu0 0
      %711 = vmatpush2.bf16.msra.mxu0 0
      %712 = vmatprep.subr.bf16.mxu0 0
      %713 = vmatpush2.bf16.msra.mxu0 0
      %714 = vmatprep.subr.bf16.mxu0 0
      %715 = vmatpush2.bf16.msra.mxu0 0
      %716 = vmatprep.subr.bf16.mxu0 0
      %717 = vmatpush2.bf16.msra.mxu0 0
      %718 = vmatprep.subr.bf16.mxu0 0
      %719 = vmatpush2.bf16.msra.mxu0 0
      %720 = vmatprep.subr.bf16.mxu0 0
      %721 = vmatpush2.bf16.msra.mxu0 0
      %722 = vmatprep.subr.bf16.mxu0 0
      %723 = vmatpush2.bf16.msra.mxu0 0
      %724 = vmatprep.mubr.bf16.mxu0 0
      %725 = vmatmul.mubr.bf16.gmra.mxu0 %v642
      %v726 = vpop.f32.mrf.mxu0
      %v727 = vadd.f32 0.0, %v726
      %v728 = vpop.f32.mrf.mxu0
      %v729 = vpop.f32.mrf.mxu0
      %v730 = vpop.f32.mrf.mxu0
      %731 = vdwg.mxu0
      %v732 = vadd.f32 %v620, %v727
      %v733 = vld [vmem:[%s6] sm:$0x1]
      %v735 = vlaneseq
      %v736 = vshrl.u32 %v735, 7
      %v737 = vsub.s32 0, %v736
      %v738 = vrot.slane %v733, %v737
      %v740 = vadd.f32 %v732, %v738
      %vm741 = vcmask 523264
      %742 = vst.msk [vmem:[%s276] sm:$0xff] %vm741, %v740
      %p743 = scmp.lt.s32.totalorder %s18, 1
      %s744 = scalar_select %p743, %s18, 1
      %s745 = smul.addr %s744, 8
      %s746 = scalar_lea.vmem %s7, %s745
      // Predicated region
      $region49: #{block_forward.3} parent=47 // pred_check
        %p747 = pneg %p188
      $region50: #{block_forward.3} parent=47 // pred_check_branch
        %749 = sbr.rel (%p747) target = $region52
      $region51: #{block_forward.3} parent=47 // pred_region
        _
      $region52: #{block_forward.3} parent=47 // pred_fallthru
        _
    $region48: #{block_forward.3} parent=5 // pred_fallthru
      _
    %p750 = scmp.le.s32.totalorder 2, %s13
    // Predicated region
    $region53: #{block_forward.3} parent=5 // pred_check
      %p751 = pneg %p750
    $region54: #{block_forward.3} parent=5 // pred_check_branch
      %753 = sbr.rel (%p751) target = $region56
    $region55: #{block_forward.3} parent=5 // pred_region
      %s754 = ssub.s32 %s13, 2
      // Predicated region
      $region57: #{block_forward.3} parent=55 // pred_check
        %p755 = pneg %p194
      $region58: #{block_forward.3} parent=55 // pred_check_branch
        %757 = sbr.rel (%p755) target = $region60
      $region59: #{block_forward.3} parent=55 // pred_region
        %p758 = scmp.lt.s32.totalorder %s19, 1
        %s759 = scalar_select %p758, %s19, 1
        %s760 = smul.addr %s759, 8
        %s761 = scalar_lea.vmem %s7, %s760
      $region60: #{block_forward.3} parent=55 // pred_fallthru
        _
    $region56: #{block_forward.3} parent=5 // pred_fallthru
      _
  $region6: #{block_forward.3} parent=0 // loop_footer
    %s17 = sadd.s32 1, %s13
  $region7: #{block_forward.3} parent=0 // loop_footer_branch
    %12 = sbr.rel target = $region3
  $region8: #{block_forward.3} parent=0 // loop_exit
    _

</llo_original>
